<compile_context>
chip_gen: v7x
topology: tpu7x:2x2x1
jax: 0.10.0
libtpu: 0.0.40
codegen_flags: <defaults>
</compile_context>

<pallas_src>
import math

import jax
import jax.numpy as jnp
from jax.experimental import pallas as pl
from jax.experimental.pallas import tpu as pltpu


# ---------------------------------------------------------------------------
# Fused kernel: K/V projection + multi-head scaled-dot attention + final linear,
# one grid step per batch element.
# ---------------------------------------------------------------------------
def _make_fused_kernel(num_heads, dph, use_mask):
    def kernel(*refs):
        if use_mask:
            (key_ref, val_ref, bias_ref,
             wk_ref, bk_ref, wv_ref, bv_ref, wf_ref, bf_ref,
             qsel_ref, selm_ref, bsum_ref, erepbig_ref, hmask_ref, rsel_ref,
             out_ref) = refs
        else:
            (key_ref, val_ref,
             wk_ref, bk_ref, wv_ref, bv_ref, wf_ref, bf_ref,
             qsel_ref, selm_ref, bsum_ref, erepbig_ref, hmask_ref, rsel_ref,
             out_ref) = refs

        key = key_ref[0]                      # (S, H)
        val = val_ref[0]                      # (S, H)

        # --- K / V projections (MXU); bias rows broadcast over S ------------
        k_proj = jnp.dot(key, wk_ref[...],
                         preferred_element_type=jnp.float32) + bk_ref[...]
        v_proj = jnp.dot(val, wv_ref[...],
                         preferred_element_type=jnp.float32) + bv_ref[...]

        # --- scores in the "expanded" (S, nh*nh) layout ----------------------
        # qsel already contains scale * q_heads routed per column chunk, so this
        # single MXU matmul yields every head's (scaled) score candidates.
        sc_all = jnp.dot(k_proj, qsel_ref[...],
                         preferred_element_type=jnp.float32)       # (S, nh*nh)
        neg_inf = jnp.float32(-jnp.inf)
        score = jnp.where(selm_ref[...] > 0.5, sc_all, neg_inf)
        if use_mask:
            score = score + bias_ref[0]       # additive 0 / -inf mask bias

        # --- per-head softmax (global shift + per column-block denominators) -
        m = jnp.max(score, keepdims=True)                           # (1, 1)
        e = jnp.exp(score - m)                                      # (S, nh*nh)
        colsum = jnp.sum(e, axis=0, keepdims=True)                  # (1, nh*nh)
        denom = jnp.dot(colsum, bsum_ref[...],
                        preferred_element_type=jnp.float32)         # per-head sums
        r = pl.reciprocal(denom, approx=True)                       # EUP
        r = r * (2.0 - denom * r)                                   # 1 Newton step
        p = e * r                                                   # probabilities
        # TODO(synk): attention dropout skipped -- identity in eval/inference.

        # --- weighted values + fused final linear ---------------------------
        p_expand = jnp.dot(p, erepbig_ref[...],
                           preferred_element_type=jnp.float32)      # (S, H)
        w = p_expand * v_proj                                       # (S, H)

        out = bf_ref[...]                                           # (1, H)
        for g in range(num_heads):                                  # static, small
            wg_sum = jnp.sum(w * hmask_ref[g], axis=0, keepdims=True)   # (1, H)
            ctx_g = jnp.dot(wg_sum, rsel_ref[...],
                            preferred_element_type=jnp.float32)     # (1, dph)
            out = out + jnp.dot(ctx_g, wf_ref[g * dph:(g + 1) * dph, :],
                                preferred_element_type=jnp.float32)
        # TODO(synk): final nn.Dropout skipped (identity in eval mode).
        out_ref[0] = out

    return kernel


def _bcast_spec(shape):
    n = len(shape)
    return pl.BlockSpec(shape, lambda b, n=n: (0,) * n)


# ---------------------------------------------------------------------------
# Wrapper
# ---------------------------------------------------------------------------
def multihead_attention_pallas(key_in, value_in, params, num_heads,
                               attn_mask=None):
    """key_in / value_in: (bsz, seq_len, H) float32.  Returns (bsz, H)."""
    bsz, S, H = key_in.shape
    assert H % num_heads == 0
    nh = num_heads
    dph = H // nh
    scale = math.sqrt(dph)   # NOTE: module MULTIPLIES by sqrt(d) (as written)
    f32 = jnp.float32

    key_in = key_in.astype(f32)
    value_in = value_in.astype(f32)
    wk = params["wk_t"].astype(f32)
    wv = params["wv_t"].astype(f32)
    wf = params["wf_t"].astype(f32)
    bk = params["bk"].reshape(1, H).astype(f32)
    bv = params["bv"].reshape(1, H).astype(f32)
    bf = params["bf"].reshape(1, H).astype(f32)

    # --- hoisted, batch-invariant query projection (computed once) ----------
    q_row = (jnp.dot(params["query"].reshape(1, H).astype(f32),
                     params["wq_t"].astype(f32),
                     precision=jax.lax.Precision.HIGHEST)
             + params["bq"].reshape(1, H).astype(f32))              # (1, H)
    q_heads = q_row.reshape(nh, dph)                                # (nh, dph)

    # --- tiny batch-invariant routing constants ------------------------------
    # They reproduce the module's raw row-major .view() head split without any
    # in-kernel reshapes.  Column convention of the expanded layout: j = g*nh + c.
    rows = jnp.arange(S)[:, None]                                   # (S, 1)
    cs = jnp.arange(nh)[None, :]                                    # (1, nh)
    g_range = jnp.arange(nh)
    head_of = (rows * nh + cs) // S                                 # (S, nh)
    colc = jnp.arange(H) // dph                                     # (H,)

    # qsel[c*dph+d, g*nh+c] = scale * q_heads[g, d]
    qsel = (scale * jnp.einsum("gd,cC->cdgC", q_heads,
                               jnp.eye(nh, dtype=f32))).reshape(H, nh * nh)
    # selm[row, g*nh+c] = 1 iff head g owns sub-key (row, c)
    selm = (head_of[:, None, :] == g_range[None, :, None]
            ).astype(f32).reshape(S, nh * nh)
    # bsum: block-diagonal ones -> per-head denominator broadcast
    blk = jnp.arange(nh * nh) // nh
    bsum = (blk[:, None] == blk[None, :]).astype(f32)               # (nh^2, nh^2)
    # erepbig[g*nh+c, col] = 1 iff col // dph == c   (prob expansion to (S, H))
    erepbig = ((jnp.arange(nh * nh) % nh)[:, None] == colc[None, :]).astype(f32)
    # hmask[g, row, col] = 1 iff head_of(row, col//dph) == g
    head_col = (rows * nh + colc[None, :]) // S                     # (S, H)
    hmask = (head_col[None, :, :] == g_range[:, None, None]).astype(f32)
    # rsel[col, d] = 1 iff col % dph == d    (strided column fold to (1, dph))
    rsel = (jnp.arange(H)[:, None] % dph == jnp.arange(dph)[None, :]).astype(f32)

    inputs = [key_in, value_in]
    in_specs = [
        pl.BlockSpec((1, S, H), lambda b: (b, 0, 0)),
        pl.BlockSpec((1, S, H), lambda b: (b, 0, 0)),
    ]

    use_mask = attn_mask is not None
    if use_mask:
        # Reproduce the module's mask plumbing: mask row (b*nh + g) % bsz is applied
        # to head g of batch b (torch .repeat semantics), built directly in the
        # kernel's expanded (row, g*nh+c) score layout as an additive 0 / -inf bias.
        mask_bool = attn_mask.astype(bool)                          # (bsz, S)
        s_idx = rows * nh + cs - head_of * S                        # (S, nh)
        src_b = (jnp.arange(bsz)[:, None, None] * nh + head_of[None]) % bsz
        gathered = mask_bool[src_b,
                             jnp.broadcast_to(s_idx[None], (bsz, S, nh))]
        bias_cmp = jnp.where(gathered, -jnp.inf, 0.0).astype(f32)   # (bsz, S, nh)
        sel4 = head_of[None, :, None, :] == g_range[None, None, :, None]
        bias_exp = jnp.where(sel4, bias_cmp[:, :, None, :], 0.0
                             ).reshape(bsz, S, nh * nh)
        inputs.append(bias_exp)
        in_specs.append(pl.BlockSpec((1, S, nh * nh), lambda b: (b, 0, 0)))

    const_inputs = [wk, bk, wv, bv, wf, bf, qsel, selm, bsum, erepbig, hmask, rsel]
    inputs += const_inputs
    in_specs += [_bcast_spec(x.shape) for x in const_inputs]

    kernel = _make_fused_kernel(nh, dph, use_mask)
    out3 = pl.pallas_call(
        kernel,
        out_shape=jax.ShapeDtypeStruct((bsz, 1, H), f32),
        grid=(bsz,),
        in_specs=in_specs,
        out_specs=pl.BlockSpec((1, 1, H), lambda b: (b, 0, 0)),
        compiler_params=pltpu.CompilerParams(
            dimension_semantics=("parallel",)),
    )(*inputs)
    return out3.reshape(bsz, H)


# ---------------------------------------------------------------------------
# Pure-JAX reference (mirrors the PyTorch forward exactly, eval mode)
# ---------------------------------------------------------------------------
def reference_forward(key_in, value_in, params, num_heads, attn_mask=None):
    bsz, seq_len, H = key_in.shape
    dph = H // num_heads
    hp = jax.lax.Precision.HIGHEST
    q0 = jnp.tile(params["query"][None, None, :], (bsz, 1, 1))
    q = jnp.matmul(q0, params["wq_t"], precision=hp) + params["bq"]
    k = jnp.matmul(key_in, params["wk_t"], precision=hp) + params["bk"]
    v = jnp.matmul(value_in, params["wv_t"], precision=hp) + params["bv"]
    q = q.reshape(bsz * num_heads, 1, dph)
    k = k.reshape(bsz * num_heads, seq_len, dph)
    v = v.reshape(bsz * num_heads, seq_len, dph)
    att = jnp.einsum("bsd,bqd->bsq", k, q, precision=hp) * math.sqrt(dph)
    if attn_mask is not None:
        m = jnp.tile(attn_mask.astype(bool)[:, :, None], (num_heads, 1, 1))
        att = jnp.where(m, -jnp.inf, att)
    att = jax.nn.softmax(att, axis=1)
    ctx = jnp.einsum("bsq,bsd->bqd", att, v, precision=hp)[:, 0, :]
    ctx = ctx.reshape(bsz, num_heads * dph)
    return jnp.matmul(ctx, params["wf_t"], precision=hp) + params["bf"]


# ---------------------------------------------------------------------------
if __name__ == "__main__":
    H = 32           # n_hidden_size
    num_heads = 4
    bsz = 2
    seq_len = 8

    rng = jax.random.PRNGKey(0)
    ks = jax.random.split(rng, 12)
    bound = 1.0 / math.sqrt(H)

    def uni(k, shape):
        return jax.random.uniform(k, shape, jnp.float32, -bound, bound)

    params = {
        # nn.Parameter(torch.zeros(n_hidden_size))
        "query": jnp.zeros((H,), jnp.float32),
        # synthetic deterministic Linear params, stored as (in, out) transposes
        "wq_t": uni(ks[0], (H, H)), "bq": uni(ks[1], (H,)),
        "wk_t": uni(ks[2], (H, H)), "bk": uni(ks[3], (H,)),
        "wv_t": uni(ks[4], (H, H)), "bv": uni(ks[5], (H,)),
        "wf_t": uni(ks[6], (H, H)), "bf": uni(ks[7], (H,)),
    }

    key_in = jax.random.normal(ks[8], (bsz, seq_len, H), jnp.float32)
    value_in = jax.random.normal(ks[9], (bsz, seq_len, H), jnp.float32)

    # --- unmasked path (no mask tensor materialized / DMA'd) ---------------
    out = multihead_attention_pallas(key_in, value_in, params, num_heads,
                                     attn_mask=None)
    out = jax.block_until_ready(out)
    ref = reference_forward(key_in, value_in, params, num_heads, attn_mask=None)
    assert out.shape == (bsz, H), out.shape
    err = float(jnp.max(jnp.abs(out - ref)))
    assert jnp.allclose(out, ref, atol=3e-3, rtol=3e-3), (
        f"unmasked mismatch vs reference: max abs err {err}")

    # --- masked path --------------------------------------------------------
    attn_mask = jax.random.uniform(ks[10], (bsz, seq_len)) > 0.5
    attn_mask = attn_mask.at[:, 0].set(False)   # keep every head partially unmasked
    out_m = multihead_attention_pallas(key_in, value_in, params, num_heads,
                                       attn_mask=attn_mask)
    out_m = jax.block_until_ready(out_m)
    ref_m = reference_forward(key_in, value_in, params, num_heads,
                              attn_mask=attn_mask)
    err_m = float(jnp.max(jnp.abs(out_m - ref_m)))
    assert jnp.allclose(out_m, ref_m, atol=3e-3, rtol=3e-3), (
        f"masked mismatch vs reference: max abs err {err_m}")

    print("KERNEL_OK")
</pallas_src>

<mosaic_0001>
module attributes {stable_mosaic.version = 11 : i64} {
  func.func @kernel(%arg0: i32, %arg1: memref<1x8x32xf32, #tpu.memory_space<vmem>>, %arg2: memref<1x8x32xf32, #tpu.memory_space<vmem>>, %arg3: memref<32x32xf32, #tpu.memory_space<vmem>>, %arg4: memref<1x32xf32, #tpu.memory_space<vmem>>, %arg5: memref<32x32xf32, #tpu.memory_space<vmem>>, %arg6: memref<1x32xf32, #tpu.memory_space<vmem>>, %arg7: memref<32x32xf32, #tpu.memory_space<vmem>>, %arg8: memref<1x32xf32, #tpu.memory_space<vmem>>, %arg9: memref<32x16xf32, #tpu.memory_space<vmem>>, %arg10: memref<8x16xf32, #tpu.memory_space<vmem>>, %arg11: memref<16x16xf32, #tpu.memory_space<vmem>>, %arg12: memref<16x32xf32, #tpu.memory_space<vmem>>, %arg13: memref<4x8x32xf32, #tpu.memory_space<vmem>>, %arg14: memref<32x8xf32, #tpu.memory_space<vmem>>, %arg15: memref<1x1x32xf32, #tpu.memory_space<vmem>>) attributes {dimension_semantics = [#tpu.dimension_semantics<parallel>], iteration_bounds = array<i64: 2>, scalar_prefetch = 0 : i64, scratch_operands = 0 : i64, tpu.core_type = #tpu.core_type<tc>, window_params = [{transform_indices = @transform_0, window_bounds = array<i64: 1, 8, 32>}, {transform_indices = @transform_1, window_bounds = array<i64: 1, 8, 32>}, {pipeline_mode = #tpu.pipeline_mode<synchronous>, transform_indices = @transform_2, window_bounds = array<i64: 32, 32>}, {pipeline_mode = #tpu.pipeline_mode<synchronous>, transform_indices = @transform_3, window_bounds = array<i64: 1, 32>}, {pipeline_mode = #tpu.pipeline_mode<synchronous>, transform_indices = @transform_4, window_bounds = array<i64: 32, 32>}, {pipeline_mode = #tpu.pipeline_mode<synchronous>, transform_indices = @transform_5, window_bounds = array<i64: 1, 32>}, {pipeline_mode = #tpu.pipeline_mode<synchronous>, transform_indices = @transform_6, window_bounds = array<i64: 32, 32>}, {pipeline_mode = #tpu.pipeline_mode<synchronous>, transform_indices = @transform_7, window_bounds = array<i64: 1, 32>}, {pipeline_mode = #tpu.pipeline_mode<synchronous>, transform_indices = @transform_8, window_bounds = array<i64: 32, 16>}, {pipeline_mode = #tpu.pipeline_mode<synchronous>, transform_indices = @transform_9, window_bounds = array<i64: 8, 16>}, {pipeline_mode = #tpu.pipeline_mode<synchronous>, transform_indices = @transform_10, window_bounds = array<i64: 16, 16>}, {pipeline_mode = #tpu.pipeline_mode<synchronous>, transform_indices = @transform_11, window_bounds = array<i64: 16, 32>}, {pipeline_mode = #tpu.pipeline_mode<synchronous>, transform_indices = @transform_12, window_bounds = array<i64: 4, 8, 32>}, {pipeline_mode = #tpu.pipeline_mode<synchronous>, transform_indices = @transform_13, window_bounds = array<i64: 32, 8>}, {transform_indices = @transform_14, window_bounds = array<i64: 1, 1, 32>}]} {
    %c0 = arith.constant 0 : index
    %c0_0 = arith.constant 0 : index
    %c0_1 = arith.constant 0 : index
    %0 = vector.load %arg1[%c0, %c0_0, %c0_1] : memref<1x8x32xf32, #tpu.memory_space<vmem>>, vector<1x8x32xf32>
    %1 = vector.shape_cast %0 : vector<1x8x32xf32> to vector<8x32xf32>
    %c0_2 = arith.constant 0 : index
    %c0_3 = arith.constant 0 : index
    %c0_4 = arith.constant 0 : index
    %2 = vector.load %arg2[%c0_2, %c0_3, %c0_4] : memref<1x8x32xf32, #tpu.memory_space<vmem>>, vector<1x8x32xf32>
    %3 = vector.shape_cast %2 : vector<1x8x32xf32> to vector<8x32xf32>
    %c0_5 = arith.constant 0 : index
    %c0_6 = arith.constant 0 : index
    %4 = vector.load %arg3[%c0_5, %c0_6] : memref<32x32xf32, #tpu.memory_space<vmem>>, vector<32x32xf32>
    %cst = arith.constant dense<0.000000e+00> : vector<8x32xf32>
    %5 = tpu.matmul %1, %4, %cst {dimension_numbers = #tpu.dot_dimension_numbers<[1], [0], [0], [1], [0, 0, 1, 1], [], []>} : vector<8x32xf32>, vector<32x32xf32>, vector<8x32xf32> -> vector<8x32xf32>
    %c0_7 = arith.constant 0 : index
    %c0_8 = arith.constant 0 : index
    %6 = vector.load %arg4[%c0_7, %c0_8] : memref<1x32xf32, #tpu.memory_space<vmem>>, vector<1x32xf32>
    %7 = vector.broadcast %6 : vector<1x32xf32> to vector<8x32xf32>
    %8 = arith.addf %5, %7 : vector<8x32xf32>
    %c0_9 = arith.constant 0 : index
    %c0_10 = arith.constant 0 : index
    %9 = vector.load %arg5[%c0_9, %c0_10] : memref<32x32xf32, #tpu.memory_space<vmem>>, vector<32x32xf32>
    %cst_11 = arith.constant dense<0.000000e+00> : vector<8x32xf32>
    %10 = tpu.matmul %3, %9, %cst_11 {dimension_numbers = #tpu.dot_dimension_numbers<[1], [0], [0], [1], [0, 0, 1, 1], [], []>} : vector<8x32xf32>, vector<32x32xf32>, vector<8x32xf32> -> vector<8x32xf32>
    %c0_12 = arith.constant 0 : index
    %c0_13 = arith.constant 0 : index
    %11 = vector.load %arg6[%c0_12, %c0_13] : memref<1x32xf32, #tpu.memory_space<vmem>>, vector<1x32xf32>
    %12 = vector.broadcast %11 : vector<1x32xf32> to vector<8x32xf32>
    %13 = arith.addf %10, %12 : vector<8x32xf32>
    %c0_14 = arith.constant 0 : index
    %c0_15 = arith.constant 0 : index
    %14 = vector.load %arg9[%c0_14, %c0_15] : memref<32x16xf32, #tpu.memory_space<vmem>>, vector<32x16xf32>
    %cst_16 = arith.constant dense<0.000000e+00> : vector<8x16xf32>
    %15 = tpu.matmul %8, %14, %cst_16 {dimension_numbers = #tpu.dot_dimension_numbers<[1], [0], [0], [1], [0, 0, 1, 1], [], []>} : vector<8x32xf32>, vector<32x16xf32>, vector<8x16xf32> -> vector<8x16xf32>
    %c0_17 = arith.constant 0 : index
    %c0_18 = arith.constant 0 : index
    %16 = vector.load %arg10[%c0_17, %c0_18] : memref<8x16xf32, #tpu.memory_space<vmem>>, vector<8x16xf32>
    %cst_19 = arith.constant 5.000000e-01 : f32
    %17 = vector.broadcast %cst_19 : f32 to vector<8x16xf32>
    %18 = arith.cmpf ogt, %16, %17 : vector<8x16xf32>
    %cst_20 = arith.constant 0xFF800000 : f32
    %19 = vector.broadcast %cst_20 : f32 to vector<8x16xf32>
    %20 = arith.select %18, %15, %19 : vector<8x16xi1>, vector<8x16xf32>
    %21 = vector.shape_cast %20 : vector<8x16xf32> to vector<1x8x16xf32>
    %cst_21 = arith.constant dense<0xFF800000> : vector<1xf32>
    %22 = vector.multi_reduction <maximumf>, %21, %cst_21 [1, 2] : vector<1x8x16xf32> to vector<1xf32>
    %23 = vector.shape_cast %22 : vector<1xf32> to vector<1x1x1xf32>
    %24 = vector.extract %23[0, 0, 0] : f32 from vector<1x1x1xf32>
    %25 = vector.broadcast %24 : f32 to vector<1x1xf32>
    %26 = vector.broadcast %25 : vector<1x1xf32> to vector<8x16xf32>
    %27 = arith.subf %20, %26 : vector<8x16xf32>
    %28 = math.exp %27 : vector<8x16xf32>
    %cst_22 = arith.constant dense<0.000000e+00> : vector<16xf32>
    %29 = vector.multi_reduction <add>, %28, %cst_22 [0] : vector<8x16xf32> to vector<16xf32>
    %30 = vector.shape_cast %29 : vector<16xf32> to vector<1x16xf32>
    %c0_23 = arith.constant 0 : index
    %c0_24 = arith.constant 0 : index
    %31 = vector.load %arg11[%c0_23, %c0_24] : memref<16x16xf32, #tpu.memory_space<vmem>>, vector<16x16xf32>
    %cst_25 = arith.constant dense<0.000000e+00> : vector<1x16xf32>
    %32 = tpu.matmul %30, %31, %cst_25 {dimension_numbers = #tpu.dot_dimension_numbers<[1], [0], [0], [1], [0, 0, 1, 1], [], []>} : vector<1x16xf32>, vector<16x16xf32>, vector<1x16xf32> -> vector<1x16xf32>
    %33 = tpu.reciprocal %32 {approx = true} : vector<1x16xf32> -> vector<1x16xf32>
    %34 = arith.mulf %32, %33 : vector<1x16xf32>
    %cst_26 = arith.constant 2.000000e+00 : f32
    %35 = vector.broadcast %cst_26 : f32 to vector<1x16xf32>
    %36 = arith.subf %35, %34 : vector<1x16xf32>
    %37 = arith.mulf %33, %36 : vector<1x16xf32>
    %38 = vector.broadcast %37 : vector<1x16xf32> to vector<8x16xf32>
    %39 = arith.mulf %28, %38 : vector<8x16xf32>
    %c0_27 = arith.constant 0 : index
    %c0_28 = arith.constant 0 : index
    %40 = vector.load %arg12[%c0_27, %c0_28] : memref<16x32xf32, #tpu.memory_space<vmem>>, vector<16x32xf32>
    %cst_29 = arith.constant dense<0.000000e+00> : vector<8x32xf32>
    %41 = tpu.matmul %39, %40, %cst_29 {dimension_numbers = #tpu.dot_dimension_numbers<[1], [0], [0], [1], [0, 0, 1, 1], [], []>} : vector<8x16xf32>, vector<16x32xf32>, vector<8x32xf32> -> vector<8x32xf32>
    %42 = arith.mulf %41, %13 : vector<8x32xf32>
    %c0_30 = arith.constant 0 : index
    %c0_31 = arith.constant 0 : index
    %43 = vector.load %arg8[%c0_30, %c0_31] : memref<1x32xf32, #tpu.memory_space<vmem>>, vector<1x32xf32>
    %c0_32 = arith.constant 0 : index
    %c0_33 = arith.constant 0 : index
    %c0_34 = arith.constant 0 : index
    %44 = vector.load %arg13[%c0_32, %c0_33, %c0_34] : memref<4x8x32xf32, #tpu.memory_space<vmem>>, vector<1x8x32xf32>
    %45 = vector.shape_cast %44 : vector<1x8x32xf32> to vector<8x32xf32>
    %46 = arith.mulf %42, %45 : vector<8x32xf32>
    %cst_35 = arith.constant dense<0.000000e+00> : vector<32xf32>
    %47 = vector.multi_reduction <add>, %46, %cst_35 [0] : vector<8x32xf32> to vector<32xf32>
    %48 = vector.shape_cast %47 : vector<32xf32> to vector<1x32xf32>
    %c0_36 = arith.constant 0 : index
    %c0_37 = arith.constant 0 : index
    %49 = vector.load %arg14[%c0_36, %c0_37] : memref<32x8xf32, #tpu.memory_space<vmem>>, vector<32x8xf32>
    %cst_38 = arith.constant dense<0.000000e+00> : vector<1x8xf32>
    %50 = tpu.matmul %48, %49, %cst_38 {dimension_numbers = #tpu.dot_dimension_numbers<[1], [0], [0], [1], [0, 0, 1, 1], [], []>} : vector<1x32xf32>, vector<32x8xf32>, vector<1x8xf32> -> vector<1x8xf32>
    %c0_39 = arith.constant 0 : index
    %c0_40 = arith.constant 0 : index
    %51 = vector.load %arg7[%c0_39, %c0_40] : memref<32x32xf32, #tpu.memory_space<vmem>>, vector<8x32xf32>
    %cst_41 = arith.constant dense<0.000000e+00> : vector<1x32xf32>
    %52 = tpu.matmul %50, %51, %cst_41 {dimension_numbers = #tpu.dot_dimension_numbers<[1], [0], [0], [1], [0, 0, 1, 1], [], []>} : vector<1x8xf32>, vector<8x32xf32>, vector<1x32xf32> -> vector<1x32xf32>
    %53 = arith.addf %43, %52 : vector<1x32xf32>
    %c1 = arith.constant 1 : index
    %c0_42 = arith.constant 0 : index
    %c0_43 = arith.constant 0 : index
    %54 = vector.load %arg13[%c1, %c0_42, %c0_43] : memref<4x8x32xf32, #tpu.memory_space<vmem>>, vector<1x8x32xf32>
    %55 = vector.shape_cast %54 : vector<1x8x32xf32> to vector<8x32xf32>
    %56 = arith.mulf %42, %55 : vector<8x32xf32>
    %cst_44 = arith.constant dense<0.000000e+00> : vector<32xf32>
    %57 = vector.multi_reduction <add>, %56, %cst_44 [0] : vector<8x32xf32> to vector<32xf32>
    %58 = vector.shape_cast %57 : vector<32xf32> to vector<1x32xf32>
    %c0_45 = arith.constant 0 : index
    %c0_46 = arith.constant 0 : index
    %59 = vector.load %arg14[%c0_45, %c0_46] : memref<32x8xf32, #tpu.memory_space<vmem>>, vector<32x8xf32>
    %cst_47 = arith.constant dense<0.000000e+00> : vector<1x8xf32>
    %60 = tpu.matmul %58, %59, %cst_47 {dimension_numbers = #tpu.dot_dimension_numbers<[1], [0], [0], [1], [0, 0, 1, 1], [], []>} : vector<1x32xf32>, vector<32x8xf32>, vector<1x8xf32> -> vector<1x8xf32>
    %c8 = arith.constant 8 : index
    %c0_48 = arith.constant 0 : index
    %61 = vector.load %arg7[%c8, %c0_48] : memref<32x32xf32, #tpu.memory_space<vmem>>, vector<8x32xf32>
    %cst_49 = arith.constant dense<0.000000e+00> : vector<1x32xf32>
    %62 = tpu.matmul %60, %61, %cst_49 {dimension_numbers = #tpu.dot_dimension_numbers<[1], [0], [0], [1], [0, 0, 1, 1], [], []>} : vector<1x8xf32>, vector<8x32xf32>, vector<1x32xf32> -> vector<1x32xf32>
    %63 = arith.addf %53, %62 : vector<1x32xf32>
    %c2 = arith.constant 2 : index
    %c0_50 = arith.constant 0 : index
    %c0_51 = arith.constant 0 : index
    %64 = vector.load %arg13[%c2, %c0_50, %c0_51] : memref<4x8x32xf32, #tpu.memory_space<vmem>>, vector<1x8x32xf32>
    %65 = vector.shape_cast %64 : vector<1x8x32xf32> to vector<8x32xf32>
    %66 = arith.mulf %42, %65 : vector<8x32xf32>
    %cst_52 = arith.constant dense<0.000000e+00> : vector<32xf32>
    %67 = vector.multi_reduction <add>, %66, %cst_52 [0] : vector<8x32xf32> to vector<32xf32>
    %68 = vector.shape_cast %67 : vector<32xf32> to vector<1x32xf32>
    %c0_53 = arith.constant 0 : index
    %c0_54 = arith.constant 0 : index
    %69 = vector.load %arg14[%c0_53, %c0_54] : memref<32x8xf32, #tpu.memory_space<vmem>>, vector<32x8xf32>
    %cst_55 = arith.constant dense<0.000000e+00> : vector<1x8xf32>
    %70 = tpu.matmul %68, %69, %cst_55 {dimension_numbers = #tpu.dot_dimension_numbers<[1], [0], [0], [1], [0, 0, 1, 1], [], []>} : vector<1x32xf32>, vector<32x8xf32>, vector<1x8xf32> -> vector<1x8xf32>
    %c16 = arith.constant 16 : index
    %c0_56 = arith.constant 0 : index
    %71 = vector.load %arg7[%c16, %c0_56] : memref<32x32xf32, #tpu.memory_space<vmem>>, vector<8x32xf32>
    %cst_57 = arith.constant dense<0.000000e+00> : vector<1x32xf32>
    %72 = tpu.matmul %70, %71, %cst_57 {dimension_numbers = #tpu.dot_dimension_numbers<[1], [0], [0], [1], [0, 0, 1, 1], [], []>} : vector<1x8xf32>, vector<8x32xf32>, vector<1x32xf32> -> vector<1x32xf32>
    %73 = arith.addf %63, %72 : vector<1x32xf32>
    %c3 = arith.constant 3 : index
    %c0_58 = arith.constant 0 : index
    %c0_59 = arith.constant 0 : index
    %74 = vector.load %arg13[%c3, %c0_58, %c0_59] : memref<4x8x32xf32, #tpu.memory_space<vmem>>, vector<1x8x32xf32>
    %75 = vector.shape_cast %74 : vector<1x8x32xf32> to vector<8x32xf32>
    %76 = arith.mulf %42, %75 : vector<8x32xf32>
    %cst_60 = arith.constant dense<0.000000e+00> : vector<32xf32>
    %77 = vector.multi_reduction <add>, %76, %cst_60 [0] : vector<8x32xf32> to vector<32xf32>
    %78 = vector.shape_cast %77 : vector<32xf32> to vector<1x32xf32>
    %c0_61 = arith.constant 0 : index
    %c0_62 = arith.constant 0 : index
    %79 = vector.load %arg14[%c0_61, %c0_62] : memref<32x8xf32, #tpu.memory_space<vmem>>, vector<32x8xf32>
    %cst_63 = arith.constant dense<0.000000e+00> : vector<1x8xf32>
    %80 = tpu.matmul %78, %79, %cst_63 {dimension_numbers = #tpu.dot_dimension_numbers<[1], [0], [0], [1], [0, 0, 1, 1], [], []>} : vector<1x32xf32>, vector<32x8xf32>, vector<1x8xf32> -> vector<1x8xf32>
    %c24 = arith.constant 24 : index
    %c0_64 = arith.constant 0 : index
    %81 = vector.load %arg7[%c24, %c0_64] : memref<32x32xf32, #tpu.memory_space<vmem>>, vector<8x32xf32>
    %cst_65 = arith.constant dense<0.000000e+00> : vector<1x32xf32>
    %82 = tpu.matmul %80, %81, %cst_65 {dimension_numbers = #tpu.dot_dimension_numbers<[1], [0], [0], [1], [0, 0, 1, 1], [], []>} : vector<1x8xf32>, vector<8x32xf32>, vector<1x32xf32> -> vector<1x32xf32>
    %83 = arith.addf %73, %82 : vector<1x32xf32>
    %c0_66 = arith.constant 0 : index
    %c0_67 = arith.constant 0 : index
    %c0_68 = arith.constant 0 : index
    %84 = vector.load %arg15[%c0_66, %c0_67, %c0_68] : memref<1x1x32xf32, #tpu.memory_space<vmem>>, vector<1x1x32xf32>
    %85 = vector.shape_cast %84 : vector<1x1x32xf32> to vector<1x32xf32>
    %86 = vector.shape_cast %83 : vector<1x32xf32> to vector<1x1x32xf32>
    tpu.vector_store %arg15[%c0_66, %c0_67, %c0_68], %86 {strides = array<i32>} : memref<1x1x32xf32, #tpu.memory_space<vmem>>, vector<1x1x32xf32>,
    return
  }
  func.func @transform_0(%arg0: i32) -> (i32, i32, i32) {
    %c0_i32 = arith.constant 0 : i32
    %c0_i32_0 = arith.constant 0 : i32
    %c0_i32_1 = arith.constant 0 : i32
    return %arg0, %c0_i32, %c0_i32_0 : i32, i32, i32
  }
  func.func @transform_1(%arg0: i32) -> (i32, i32, i32) {
    %c0_i32 = arith.constant 0 : i32
    %c0_i32_0 = arith.constant 0 : i32
    %c0_i32_1 = arith.constant 0 : i32
    return %arg0, %c0_i32, %c0_i32_0 : i32, i32, i32
  }
  func.func @transform_2(%arg0: i32) -> (i32, i32) {
    %c0_i32 = arith.constant 0 : i32
    %c0_i32_0 = arith.constant 0 : i32
    %c0_i32_1 = arith.constant 0 : i32
    return %c0_i32, %c0_i32_0 : i32, i32
  }
  func.func @transform_3(%arg0: i32) -> (i32, i32) {
    %c0_i32 = arith.constant 0 : i32
    %c0_i32_0 = arith.constant 0 : i32
    %c0_i32_1 = arith.constant 0 : i32
    return %c0_i32, %c0_i32_0 : i32, i32
  }
  func.func @transform_4(%arg0: i32) -> (i32, i32) {
    %c0_i32 = arith.constant 0 : i32
    %c0_i32_0 = arith.constant 0 : i32
    %c0_i32_1 = arith.constant 0 : i32
    return %c0_i32, %c0_i32_0 : i32, i32
  }
  func.func @transform_5(%arg0: i32) -> (i32, i32) {
    %c0_i32 = arith.constant 0 : i32
    %c0_i32_0 = arith.constant 0 : i32
    %c0_i32_1 = arith.constant 0 : i32
    return %c0_i32, %c0_i32_0 : i32, i32
  }
  func.func @transform_6(%arg0: i32) -> (i32, i32) {
    %c0_i32 = arith.constant 0 : i32
    %c0_i32_0 = arith.constant 0 : i32
    %c0_i32_1 = arith.constant 0 : i32
    return %c0_i32, %c0_i32_0 : i32, i32
  }
  func.func @transform_7(%arg0: i32) -> (i32, i32) {
    %c0_i32 = arith.constant 0 : i32
    %c0_i32_0 = arith.constant 0 : i32
    %c0_i32_1 = arith.constant 0 : i32
    return %c0_i32, %c0_i32_0 : i32, i32
  }
  func.func @transform_8(%arg0: i32) -> (i32, i32) {
    %c0_i32 = arith.constant 0 : i32
    %c0_i32_0 = arith.constant 0 : i32
    %c0_i32_1 = arith.constant 0 : i32
    return %c0_i32, %c0_i32_0 : i32, i32
  }
  func.func @transform_9(%arg0: i32) -> (i32, i32) {
    %c0_i32 = arith.constant 0 : i32
    %c0_i32_0 = arith.constant 0 : i32
    %c0_i32_1 = arith.constant 0 : i32
    return %c0_i32, %c0_i32_0 : i32, i32
  }
  func.func @transform_10(%arg0: i32) -> (i32, i32) {
    %c0_i32 = arith.constant 0 : i32
    %c0_i32_0 = arith.constant 0 : i32
    %c0_i32_1 = arith.constant 0 : i32
    return %c0_i32, %c0_i32_0 : i32, i32
  }
  func.func @transform_11(%arg0: i32) -> (i32, i32) {
    %c0_i32 = arith.constant 0 : i32
    %c0_i32_0 = arith.constant 0 : i32
    %c0_i32_1 = arith.constant 0 : i32
    return %c0_i32, %c0_i32_0 : i32, i32
  }
  func.func @transform_12(%arg0: i32) -> (i32, i32, i32) {
    %c0_i32 = arith.constant 0 : i32
    %c0_i32_0 = arith.constant 0 : i32
    %c0_i32_1 = arith.constant 0 : i32
    %c0_i32_2 = arith.constant 0 : i32
    return %c0_i32, %c0_i32_0, %c0_i32_1 : i32, i32, i32
  }
  func.func @transform_13(%arg0: i32) -> (i32, i32) {
    %c0_i32 = arith.constant 0 : i32
    %c0_i32_0 = arith.constant 0 : i32
    %c0_i32_1 = arith.constant 0 : i32
    return %c0_i32, %c0_i32_0 : i32, i32
  }
  func.func @transform_14(%arg0: i32) -> (i32, i32, i32) {
    %c0_i32 = arith.constant 0 : i32
    %c0_i32_0 = arith.constant 0 : i32
    %c0_i32_1 = arith.constant 0 : i32
    return %arg0, %c0_i32, %c0_i32_0 : i32, i32, i32
  }
}

</mosaic_0001>

<llo_original>
// kernel: tpu_custom_call.1
$region0: #{tpu_custom_call.1}
  #allocation0 [shape = 'u32[]', space=smem, size = 0x4, offset = 0x4, fixed_abs, tag = 'smem constant byte address 0x4 - core index']
  #allocation1 [shape = 'u32[144,128]{1,0:T(1,128)}', space=vmem, size = 0x12000, scoped, tag = 'internal scratch']
  %s0 = inlined_call_operand.hbm [shape: f32[2,8,32], index: 0, kind: input, shape index: {}]
  %s1 = inlined_call_operand.hbm [shape: f32[2,8,32], index: 1, kind: input, shape index: {}]
  %s2 = inlined_call_operand.vmem [shape: f32[32,32], index: 2, kind: input, shape index: {}]
  %s3 = inlined_call_operand.vmem [shape: f32[1,32], index: 3, kind: input, shape index: {}]
  %s4 = inlined_call_operand.vmem [shape: f32[32,32], index: 4, kind: input, shape index: {}]
  %s5 = inlined_call_operand.hbm [shape: f32[1,32], index: 5, kind: input, shape index: {}]
  %s6 = inlined_call_operand.vmem [shape: f32[32,32], index: 6, kind: input, shape index: {}]
  %s7 = inlined_call_operand.hbm [shape: f32[1,32], index: 7, kind: input, shape index: {}]
  %s8 = inlined_call_operand.vmem [shape: f32[32,16], index: 8, kind: input, shape index: {}]
  %s9 = inlined_call_operand.hbm [shape: f32[8,16], index: 9, kind: input, shape index: {}]
  %s10 = inlined_call_operand.hbm [shape: f32[16,16], index: 10, kind: input, shape index: {}]
  %s11 = inlined_call_operand.hbm [shape: f32[16,32], index: 11, kind: input, shape index: {}]
  %s12 = inlined_call_operand.vmem [shape: f32[4,8,32], index: 12, kind: input, shape index: {}]
  %s13 = inlined_call_operand.vmem [shape: f32[32,8], index: 13, kind: input, shape index: {}]
  %s14 = inlined_call_operand.hbm [shape: f32[2,1,32], index: 14, kind: output, shape index: {}]
  %s15 = sld [smem:[#allocation0]]
  $region117: #{tpu_custom_call.1} parent=0
    _
  %s17 = ssub.s32 1, %s15
  %s18 = scalar_select 0, %s17, %s15
  $region1: #{tpu_custom_call.1} parent=0
    #allocation2 [shape = 'u8[8192]{0}', space=vmem, size = 0x2000, scoped, tag = 'input window, operand 0']
    #allocation3 [shape = 's32[2]{0}', space=sflag, size = 0x8, scoped, tag = 'scoped memory for tpu_custom_call.1']
    #allocation4 [shape = 's32[2]{0}', space=sflag, size = 0x8, scoped, tag = 'scoped memory for tpu_custom_call.1']
    #allocation5 [shape = 'u8[8192]{0}', space=vmem, size = 0x2000, scoped, tag = 'input window, operand 1']
    #allocation6 [shape = 's32[2]{0}', space=sflag, size = 0x8, scoped, tag = 'scoped memory for tpu_custom_call.1']
    #allocation7 [shape = 'u8[512]{0}', space=vmem, size = 0x400, scoped, tag = 'input window, operand 5, single buffered']
    #allocation8 [shape = 'u8[512]{0}', space=vmem, size = 0x400, scoped, tag = 'input window, operand 7, single buffered']
    #allocation9 [shape = 's32[1]{0}', space=sflag, size = 0x4, scoped, tag = 'scoped memory for tpu_custom_call.1']
    #allocation10 [shape = 'u8[4096]{0}', space=vmem, size = 0x1000, scoped, tag = 'input window, operand 9, single buffered']
    #allocation11 [shape = 'u8[8192]{0}', space=vmem, size = 0x2000, scoped, tag = 'input window, operand 10, single buffered']
    #allocation12 [shape = 's32[1]{0}', space=sflag, size = 0x4, scoped, tag = 'scoped memory for tpu_custom_call.1']
    #allocation13 [shape = 'u8[8192]{0}', space=vmem, size = 0x2000, scoped, tag = 'input window, operand 11, single buffered']
    #allocation14 [shape = 'u8[1024]{0}', space=vmem, size = 0x400, scoped, tag = 'output window, operand 0']
    %19 = vsyncpa [#allocation3], 0
    %s20 = scalar_lea.sflag [#allocation3], 1
    %21 = vsyncpa %s20, 0
    %22 = vsyncpa [#allocation6], 0
    %s23 = scalar_lea.sflag [#allocation6], 1
    %24 = vsyncpa %s23, 0
    %25 = vsyncpa [#allocation9], 0
    %26 = vsyncpa [#allocation12], 0
    %27 = vsyncpa [#allocation4], 0
    %s28 = scalar_lea.sflag [#allocation4], 1
    %29 = vsyncpa %s28, 0
    loop: start=0, step=1, limit=4
    $region2: #{tpu_custom_call.1} parent=1 // loop_pre_header
      _
    $region3: #{tpu_custom_call.1} parent=1 // loop_header
      %s31 = sphi 0, %s35
      %p32 = scmp.ge.s32.totalorder %s31, 4
      %s41 = sphi 0, %s43
      %s44 = sphi 0, %s41
      %s45 = sphi 0, %s44
      %s61 = sphi 0, %s45
      %s67 = sphi 0, %s69
      %s70 = sphi 0, %s67
      %s71 = sphi 0, %s70
      %s87 = sphi 0, %s71
      %s91 = sphi 0, %s91
      %s93 = sphi 0, %s91
      %s94 = sphi 0, %s93
      %s108 = sphi 0, %s94
      %s112 = sphi 0, %s112
      %s114 = sphi 0, %s112
      %s115 = sphi 0, %s114
      %s129 = sphi 0, %s115
      %s133 = sphi 0, %s133
      %s135 = sphi 0, %s133
      %s136 = sphi 0, %s135
      %s150 = sphi 0, %s136
      %s154 = sphi 0, %s154
      %s156 = sphi 0, %s154
      %s157 = sphi 0, %s156
      %s171 = sphi 0, %s157
      %s175 = sphi 0, %s175
      %s177 = sphi 0, %s175
      %s178 = sphi 0, %s177
      %s192 = sphi 0, %s178
      %s196 = sphi 0, %s196
      %s198 = sphi 0, %s196
      %s199 = sphi 0, %s198
      %s213 = sphi 0, %s199
      %s217 = sphi 0, %s217
      %s219 = sphi 0, %s217
      %s220 = sphi 0, %s219
      %s234 = sphi 0, %s220
      %s238 = sphi 0, %s238
      %s240 = sphi 0, %s238
      %s241 = sphi 0, %s240
      %s255 = sphi 0, %s241
      %s259 = sphi 0, %s259
      %s261 = sphi 0, %s259
      %s262 = sphi 0, %s261
      %s276 = sphi 0, %s262
      %s280 = sphi 0, %s280
      %s282 = sphi 0, %s280
      %s283 = sphi 0, %s282
      %s297 = sphi 0, %s283
      %s301 = sphi 0, %s301
      %s303 = sphi 0, %s301
      %s304 = sphi 0, %s303
      %s318 = sphi 0, %s304
      %s322 = sphi 0, %s322
      %s324 = sphi 0, %s322
      %s325 = sphi 0, %s324
      %s339 = sphi 0, %s325
      %s345 = sphi 0, %s347
      %s348 = sphi 0, %s345
      %s349 = sphi 0, %s348
      %s365 = sphi 0, %s349
    $region4: #{tpu_custom_call.1} parent=1 // loop_header_branch
      %34 = sbr.rel (%p32) target = $region8
    $region5: #{tpu_custom_call.1} parent=1 // loop_body
      %s36 = ssub.s32 %s31, 1
      %s37 = ssub.s32 %s31, 2
      %s38 = sadd.s32 %s31, 1
      %s39 = ssub.s32 %s31, %s38
      %p40 = scmp.eq.s32.totalorder %s39, 0
      %s42 = sadd.s32 %s41, 1
      %s43 = scalar_select %p40, %s41, %s42
      %p46 = pneg %p40
      %p47 = scmp.eq.s32.totalorder %s31, 1
      %p48 = por %p46, %p47
      %p49 = scmp.ne.s32.totalorder %s41, %s44
      %p50 = scmp.eq.s32.totalorder %s31, 0
      %p51 = por %p49, %p50
      %p52 = scmp.ne.s32.totalorder %s41, %s44
      %p53 = scmp.eq.s32.totalorder %s36, 1
      %p54 = por %p52, %p53
      %p55 = scmp.ne.s32.totalorder %s44, %s45
      %p56 = scmp.eq.s32.totalorder %s36, 0
      %p57 = por %p55, %p56
      %p58 = scmp.ne.s32.totalorder %s44, %s45
      %p59 = scmp.eq.s32.totalorder %s37, 1
      %p60 = por %p58, %p59
      %p62 = scmp.ne.s32.totalorder %s45, %s61
      %p63 = scmp.eq.s32.totalorder %s37, 0
      %p64 = por %p62, %p63
      %s65 = ssub.s32 %s31, %s38
      %p66 = scmp.eq.s32.totalorder %s65, 0
      %s68 = sadd.s32 %s67, 1
      %s69 = scalar_select %p66, %s67, %s68
      %p72 = pneg %p66
      %p73 = scmp.eq.s32.totalorder %s31, 1
      %p74 = por %p72, %p73
      %p75 = scmp.ne.s32.totalorder %s67, %s70
      %p76 = scmp.eq.s32.totalorder %s31, 0
      %p77 = por %p75, %p76
      %p78 = scmp.ne.s32.totalorder %s67, %s70
      %p79 = scmp.eq.s32.totalorder %s36, 1
      %p80 = por %p78, %p79
      %p81 = scmp.ne.s32.totalorder %s70, %s71
      %p82 = scmp.eq.s32.totalorder %s36, 0
      %p83 = por %p81, %p82
      %p84 = scmp.ne.s32.totalorder %s70, %s71
      %p85 = scmp.eq.s32.totalorder %s37, 1
      %p86 = por %p84, %p85
      %p88 = scmp.ne.s32.totalorder %s71, %s87
      %p89 = scmp.eq.s32.totalorder %s37, 0
      %p90 = por %p88, %p89
      %s92 = sadd.s32 %s91, 1
      %p95 = scmp.eq.s32.totalorder %s31, 1
      %p96 = scmp.ne.s32.totalorder %s91, %s93
      %p97 = scmp.eq.s32.totalorder %s31, 0
      %p98 = por %p96, %p97
      %p99 = scmp.ne.s32.totalorder %s91, %s93
      %p100 = scmp.eq.s32.totalorder %s36, 1
      %p101 = por %p99, %p100
      %p102 = scmp.ne.s32.totalorder %s93, %s94
      %p103 = scmp.eq.s32.totalorder %s36, 0
      %p104 = por %p102, %p103
      %p105 = scmp.ne.s32.totalorder %s93, %s94
      %p106 = scmp.eq.s32.totalorder %s37, 1
      %p107 = por %p105, %p106
      %p109 = scmp.ne.s32.totalorder %s94, %s108
      %p110 = scmp.eq.s32.totalorder %s37, 0
      %p111 = por %p109, %p110
      %s113 = sadd.s32 %s112, 1
      %p116 = scmp.eq.s32.totalorder %s31, 1
      %p117 = scmp.ne.s32.totalorder %s112, %s114
      %p118 = scmp.eq.s32.totalorder %s31, 0
      %p119 = por %p117, %p118
      %p120 = scmp.ne.s32.totalorder %s112, %s114
      %p121 = scmp.eq.s32.totalorder %s36, 1
      %p122 = por %p120, %p121
      %p123 = scmp.ne.s32.totalorder %s114, %s115
      %p124 = scmp.eq.s32.totalorder %s36, 0
      %p125 = por %p123, %p124
      %p126 = scmp.ne.s32.totalorder %s114, %s115
      %p127 = scmp.eq.s32.totalorder %s37, 1
      %p128 = por %p126, %p127
      %p130 = scmp.ne.s32.totalorder %s115, %s129
      %p131 = scmp.eq.s32.totalorder %s37, 0
      %p132 = por %p130, %p131
      %s134 = sadd.s32 %s133, 1
      %p137 = scmp.eq.s32.totalorder %s31, 1
      %p138 = scmp.ne.s32.totalorder %s133, %s135
      %p139 = scmp.eq.s32.totalorder %s31, 0
      %p140 = por %p138, %p139
      %p141 = scmp.ne.s32.totalorder %s133, %s135
      %p142 = scmp.eq.s32.totalorder %s36, 1
      %p143 = por %p141, %p142
      %p144 = scmp.ne.s32.totalorder %s135, %s136
      %p145 = scmp.eq.s32.totalorder %s36, 0
      %p146 = por %p144, %p145
      %p147 = scmp.ne.s32.totalorder %s135, %s136
      %p148 = scmp.eq.s32.totalorder %s37, 1
      %p149 = por %p147, %p148
      %p151 = scmp.ne.s32.totalorder %s136, %s150
      %p152 = scmp.eq.s32.totalorder %s37, 0
      %p153 = por %p151, %p152
      %s155 = sadd.s32 %s154, 1
      %p158 = scmp.eq.s32.totalorder %s31, 1
      %p159 = scmp.ne.s32.totalorder %s154, %s156
      %p160 = scmp.eq.s32.totalorder %s31, 0
      %p161 = por %p159, %p160
      %p162 = scmp.ne.s32.totalorder %s154, %s156
      %p163 = scmp.eq.s32.totalorder %s36, 1
      %p164 = por %p162, %p163
      %p165 = scmp.ne.s32.totalorder %s156, %s157
      %p166 = scmp.eq.s32.totalorder %s36, 0
      %p167 = por %p165, %p166
      %p168 = scmp.ne.s32.totalorder %s156, %s157
      %p169 = scmp.eq.s32.totalorder %s37, 1
      %p170 = por %p168, %p169
      %p172 = scmp.ne.s32.totalorder %s157, %s171
      %p173 = scmp.eq.s32.totalorder %s37, 0
      %p174 = por %p172, %p173
      %s176 = sadd.s32 %s175, 1
      %p179 = scmp.eq.s32.totalorder %s31, 1
      %p180 = scmp.ne.s32.totalorder %s175, %s177
      %p181 = scmp.eq.s32.totalorder %s31, 0
      %p182 = por %p180, %p181
      %p183 = scmp.ne.s32.totalorder %s175, %s177
      %p184 = scmp.eq.s32.totalorder %s36, 1
      %p185 = por %p183, %p184
      %p186 = scmp.ne.s32.totalorder %s177, %s178
      %p187 = scmp.eq.s32.totalorder %s36, 0
      %p188 = por %p186, %p187
      %p189 = scmp.ne.s32.totalorder %s177, %s178
      %p190 = scmp.eq.s32.totalorder %s37, 1
      %p191 = por %p189, %p190
      %p193 = scmp.ne.s32.totalorder %s178, %s192
      %p194 = scmp.eq.s32.totalorder %s37, 0
      %p195 = por %p193, %p194
      %s197 = sadd.s32 %s196, 1
      %p200 = scmp.eq.s32.totalorder %s31, 1
      %p201 = scmp.ne.s32.totalorder %s196, %s198
      %p202 = scmp.eq.s32.totalorder %s31, 0
      %p203 = por %p201, %p202
      %p204 = scmp.ne.s32.totalorder %s196, %s198
      %p205 = scmp.eq.s32.totalorder %s36, 1
      %p206 = por %p204, %p205
      %p207 = scmp.ne.s32.totalorder %s198, %s199
      %p208 = scmp.eq.s32.totalorder %s36, 0
      %p209 = por %p207, %p208
      %p210 = scmp.ne.s32.totalorder %s198, %s199
      %p211 = scmp.eq.s32.totalorder %s37, 1
      %p212 = por %p210, %p211
      %p214 = scmp.ne.s32.totalorder %s199, %s213
      %p215 = scmp.eq.s32.totalorder %s37, 0
      %p216 = por %p214, %p215
      %s218 = sadd.s32 %s217, 1
      %p221 = scmp.eq.s32.totalorder %s31, 1
      %p222 = scmp.ne.s32.totalorder %s217, %s219
      %p223 = scmp.eq.s32.totalorder %s31, 0
      %p224 = por %p222, %p223
      %p225 = scmp.ne.s32.totalorder %s217, %s219
      %p226 = scmp.eq.s32.totalorder %s36, 1
      %p227 = por %p225, %p226
      %p228 = scmp.ne.s32.totalorder %s219, %s220
      %p229 = scmp.eq.s32.totalorder %s36, 0
      %p230 = por %p228, %p229
      %p231 = scmp.ne.s32.totalorder %s219, %s220
      %p232 = scmp.eq.s32.totalorder %s37, 1
      %p233 = por %p231, %p232
      %p235 = scmp.ne.s32.totalorder %s220, %s234
      %p236 = scmp.eq.s32.totalorder %s37, 0
      %p237 = por %p235, %p236
      %s239 = sadd.s32 %s238, 1
      %p242 = scmp.eq.s32.totalorder %s31, 1
      %p243 = scmp.ne.s32.totalorder %s238, %s240
      %p244 = scmp.eq.s32.totalorder %s31, 0
      %p245 = por %p243, %p244
      %p246 = scmp.ne.s32.totalorder %s238, %s240
      %p247 = scmp.eq.s32.totalorder %s36, 1
      %p248 = por %p246, %p247
      %p249 = scmp.ne.s32.totalorder %s240, %s241
      %p250 = scmp.eq.s32.totalorder %s36, 0
      %p251 = por %p249, %p250
      %p252 = scmp.ne.s32.totalorder %s240, %s241
      %p253 = scmp.eq.s32.totalorder %s37, 1
      %p254 = por %p252, %p253
      %p256 = scmp.ne.s32.totalorder %s241, %s255
      %p257 = scmp.eq.s32.totalorder %s37, 0
      %p258 = por %p256, %p257
      %s260 = sadd.s32 %s259, 1
      %p263 = scmp.eq.s32.totalorder %s31, 1
      %p264 = scmp.ne.s32.totalorder %s259, %s261
      %p265 = scmp.eq.s32.totalorder %s31, 0
      %p266 = por %p264, %p265
      %p267 = scmp.ne.s32.totalorder %s259, %s261
      %p268 = scmp.eq.s32.totalorder %s36, 1
      %p269 = por %p267, %p268
      %p270 = scmp.ne.s32.totalorder %s261, %s262
      %p271 = scmp.eq.s32.totalorder %s36, 0
      %p272 = por %p270, %p271
      %p273 = scmp.ne.s32.totalorder %s261, %s262
      %p274 = scmp.eq.s32.totalorder %s37, 1
      %p275 = por %p273, %p274
      %p277 = scmp.ne.s32.totalorder %s262, %s276
      %p278 = scmp.eq.s32.totalorder %s37, 0
      %p279 = por %p277, %p278
      %s281 = sadd.s32 %s280, 1
      %p284 = scmp.eq.s32.totalorder %s31, 1
      %p285 = scmp.ne.s32.totalorder %s280, %s282
      %p286 = scmp.eq.s32.totalorder %s31, 0
      %p287 = por %p285, %p286
      %p288 = scmp.ne.s32.totalorder %s280, %s282
      %p289 = scmp.eq.s32.totalorder %s36, 1
      %p290 = por %p288, %p289
      %p291 = scmp.ne.s32.totalorder %s282, %s283
      %p292 = scmp.eq.s32.totalorder %s36, 0
      %p293 = por %p291, %p292
      %p294 = scmp.ne.s32.totalorder %s282, %s283
      %p295 = scmp.eq.s32.totalorder %s37, 1
      %p296 = por %p294, %p295
      %p298 = scmp.ne.s32.totalorder %s283, %s297
      %p299 = scmp.eq.s32.totalorder %s37, 0
      %p300 = por %p298, %p299
      %s302 = sadd.s32 %s301, 1
      %p305 = scmp.eq.s32.totalorder %s31, 1
      %p306 = scmp.ne.s32.totalorder %s301, %s303
      %p307 = scmp.eq.s32.totalorder %s31, 0
      %p308 = por %p306, %p307
      %p309 = scmp.ne.s32.totalorder %s301, %s303
      %p310 = scmp.eq.s32.totalorder %s36, 1
      %p311 = por %p309, %p310
      %p312 = scmp.ne.s32.totalorder %s303, %s304
      %p313 = scmp.eq.s32.totalorder %s36, 0
      %p314 = por %p312, %p313
      %p315 = scmp.ne.s32.totalorder %s303, %s304
      %p316 = scmp.eq.s32.totalorder %s37, 1
      %p317 = por %p315, %p316
      %p319 = scmp.ne.s32.totalorder %s304, %s318
      %p320 = scmp.eq.s32.totalorder %s37, 0
      %p321 = por %p319, %p320
      %s323 = sadd.s32 %s322, 1
      %p326 = scmp.eq.s32.totalorder %s31, 1
      %p327 = scmp.ne.s32.totalorder %s322, %s324
      %p328 = scmp.eq.s32.totalorder %s31, 0
      %p329 = por %p327, %p328
      %p330 = scmp.ne.s32.totalorder %s322, %s324
      %p331 = scmp.eq.s32.totalorder %s36, 1
      %p332 = por %p330, %p331
      %p333 = scmp.ne.s32.totalorder %s324, %s325
      %p334 = scmp.eq.s32.totalorder %s36, 0
      %p335 = por %p333, %p334
      %p336 = scmp.ne.s32.totalorder %s324, %s325
      %p337 = scmp.eq.s32.totalorder %s37, 1
      %p338 = por %p336, %p337
      %p340 = scmp.ne.s32.totalorder %s325, %s339
      %p341 = scmp.eq.s32.totalorder %s37, 0
      %p342 = por %p340, %p341
      %s343 = ssub.s32 %s31, %s38
      %p344 = scmp.eq.s32.totalorder %s343, 0
      %s346 = sadd.s32 %s345, 1
      %s347 = scalar_select %p344, %s345, %s346
      %p350 = pneg %p344
      %p351 = scmp.eq.s32.totalorder %s31, 1
      %p352 = por %p350, %p351
      %p353 = scmp.ne.s32.totalorder %s345, %s348
      %p354 = scmp.eq.s32.totalorder %s31, 0
      %p355 = por %p353, %p354
      %p356 = scmp.ne.s32.totalorder %s345, %s348
      %p357 = scmp.eq.s32.totalorder %s36, 1
      %p358 = por %p356, %p357
      %p359 = scmp.ne.s32.totalorder %s348, %s349
      %p360 = scmp.eq.s32.totalorder %s36, 0
      %p361 = por %p359, %p360
      %p362 = scmp.ne.s32.totalorder %s348, %s349
      %p363 = scmp.eq.s32.totalorder %s37, 1
      %p364 = por %p362, %p363
      %p366 = scmp.ne.s32.totalorder %s349, %s365
      %p367 = scmp.eq.s32.totalorder %s37, 0
      %p368 = por %p366, %p367
      %p369 = scmp.le.s32.totalorder 1, %s31
      %p370 = scmp.lt.s32.totalorder %s31, 3
      %p371 = pnand %p369, %p370
      %p372 = pneg %p371
      // Predicated region
      $region9: #{tpu_custom_call.1} parent=5 // pred_check
        _
      $region10: #{tpu_custom_call.1} parent=5 // pred_check_branch
        %374 = sbr.rel (%p371) target = $region12
      $region11: #{tpu_custom_call.1} parent=5 // pred_region
        %s375 = ssub.s32 %s31, 1
        // Predicated region
        $region13: #{tpu_custom_call.1} parent=11 // pred_check
          %p376 = pneg %p104
        $region14: #{tpu_custom_call.1} parent=11 // pred_check_branch
          %378 = sbr.rel (%p376) target = $region16
        $region15: #{tpu_custom_call.1} parent=11 // pred_region
          _
        $region16: #{tpu_custom_call.1} parent=11 // pred_fallthru
          _
        // Predicated region
        $region17: #{tpu_custom_call.1} parent=11 // pred_check
          %p379 = pneg %p125
        $region18: #{tpu_custom_call.1} parent=11 // pred_check_branch
          %381 = sbr.rel (%p379) target = $region20
        $region19: #{tpu_custom_call.1} parent=11 // pred_region
          _
        $region20: #{tpu_custom_call.1} parent=11 // pred_fallthru
          _
        // Predicated region
        $region21: #{tpu_custom_call.1} parent=11 // pred_check
          %p382 = pneg %p146
        $region22: #{tpu_custom_call.1} parent=11 // pred_check_branch
          %384 = sbr.rel (%p382) target = $region24
        $region23: #{tpu_custom_call.1} parent=11 // pred_region
          _
        $region24: #{tpu_custom_call.1} parent=11 // pred_fallthru
          _
        // Predicated region
        $region25: #{tpu_custom_call.1} parent=11 // pred_check
          %p385 = pneg %p167
        $region26: #{tpu_custom_call.1} parent=11 // pred_check_branch
          %387 = sbr.rel (%p385) target = $region28
        $region27: #{tpu_custom_call.1} parent=11 // pred_region
          %s389 = ssub.s32 16, 16
          %390 = vsyncadd [#allocation6], %s389
          %s392 = sshll.u32 [#allocation7], 4
          %s393 = int_to_ptr.vmem [resolvable:$true] %s392
          %395 = dma.hbm_to_vmem [thread:$0]  %s5, 16, %s393, [#allocation6]
        $region28: #{tpu_custom_call.1} parent=11 // pred_fallthru
          _
        // Predicated region
        $region29: #{tpu_custom_call.1} parent=11 // pred_check
          %p396 = pneg %p188
        $region30: #{tpu_custom_call.1} parent=11 // pred_check_branch
          %398 = sbr.rel (%p396) target = $region32
        $region31: #{tpu_custom_call.1} parent=11 // pred_region
          _
        $region32: #{tpu_custom_call.1} parent=11 // pred_fallthru
          _
        // Predicated region
        $region33: #{tpu_custom_call.1} parent=11 // pred_check
          %p399 = pneg %p209
        $region34: #{tpu_custom_call.1} parent=11 // pred_check_branch
          %401 = sbr.rel (%p399) target = $region36
        $region35: #{tpu_custom_call.1} parent=11 // pred_region
          %s403 = ssub.s32 16, 16
          %404 = vsyncadd [#allocation9], %s403
          %s406 = sshll.u32 [#allocation8], 4
          %s407 = int_to_ptr.vmem [resolvable:$true] %s406
          %409 = dma.hbm_to_vmem [thread:$0]  %s7, 16, %s407, [#allocation9]
        $region36: #{tpu_custom_call.1} parent=11 // pred_fallthru
          _
        // Predicated region
        $region37: #{tpu_custom_call.1} parent=11 // pred_check
          %p410 = pneg %p230
        $region38: #{tpu_custom_call.1} parent=11 // pred_check_branch
          %412 = sbr.rel (%p410) target = $region40
        $region39: #{tpu_custom_call.1} parent=11 // pred_region
          _
        $region40: #{tpu_custom_call.1} parent=11 // pred_fallthru
          _
        // Predicated region
        $region41: #{tpu_custom_call.1} parent=11 // pred_check
          %p413 = pneg %p251
        $region42: #{tpu_custom_call.1} parent=11 // pred_check_branch
          %415 = sbr.rel (%p413) target = $region44
        $region43: #{tpu_custom_call.1} parent=11 // pred_region
          %s417 = ssub.s32 128, 128
          %418 = vsyncadd [#allocation9], %s417
          %s420 = sshll.u32 [#allocation10], 4
          %s421 = int_to_ptr.vmem [resolvable:$true] %s420
          %423 = dma.hbm_to_vmem [thread:$0]  %s9, 128, %s421, [#allocation9]
        $region44: #{tpu_custom_call.1} parent=11 // pred_fallthru
          _
        // Predicated region
        $region45: #{tpu_custom_call.1} parent=11 // pred_check
          %p424 = pneg %p272
        $region46: #{tpu_custom_call.1} parent=11 // pred_check_branch
          %426 = sbr.rel (%p424) target = $region48
        $region47: #{tpu_custom_call.1} parent=11 // pred_region
          %s428 = ssub.s32 256, 256
          %429 = vsyncadd [#allocation12], %s428
          %s430 = sshll.u32 [#allocation11], 4
          %s431 = int_to_ptr.vmem [resolvable:$true] %s430
          %436 = dma.hbm_to_vmem [thread:$0]  %s10, 256, %s431, [#allocation12], 128, 128, 8
        $region48: #{tpu_custom_call.1} parent=11 // pred_fallthru
          _
        // Predicated region
        $region49: #{tpu_custom_call.1} parent=11 // pred_check
          %p437 = pneg %p293
        $region50: #{tpu_custom_call.1} parent=11 // pred_check_branch
          %439 = sbr.rel (%p437) target = $region52
        $region51: #{tpu_custom_call.1} parent=11 // pred_region
          %s441 = ssub.s32 256, 256
          %442 = vsyncadd [#allocation12], %s441
          %s443 = sshll.u32 [#allocation13], 4
          %s444 = int_to_ptr.vmem [resolvable:$true] %s443
          %449 = dma.hbm_to_vmem [thread:$0]  %s11, 256, %s444, [#allocation12], 128, 128, 8
        $region52: #{tpu_custom_call.1} parent=11 // pred_fallthru
          _
        // Predicated region
        $region53: #{tpu_custom_call.1} parent=11 // pred_check
          %p450 = pneg %p314
        $region54: #{tpu_custom_call.1} parent=11 // pred_check_branch
          %452 = sbr.rel (%p450) target = $region56
        $region55: #{tpu_custom_call.1} parent=11 // pred_region
          _
        $region56: #{tpu_custom_call.1} parent=11 // pred_fallthru
          _
        // Predicated region
        $region57: #{tpu_custom_call.1} parent=11 // pred_check
          %p453 = pneg %p335
        $region58: #{tpu_custom_call.1} parent=11 // pred_check_branch
          %455 = sbr.rel (%p453) target = $region60
        $region59: #{tpu_custom_call.1} parent=11 // pred_region
          _
        $region60: #{tpu_custom_call.1} parent=11 // pred_fallthru
          _
      $region12: #{tpu_custom_call.1} parent=5 // pred_fallthru
        _
      %p456 = scmp.lt.s32.totalorder %s31, 2
      // Predicated region
      $region61: #{tpu_custom_call.1} parent=5 // pred_check
        %p457 = pneg %p456
      $region62: #{tpu_custom_call.1} parent=5 // pred_check_branch
        %459 = sbr.rel (%p457) target = $region64
      $region63: #{tpu_custom_call.1} parent=5 // pred_region
        // Predicated region
        $region65: #{tpu_custom_call.1} parent=63 // pred_check
          %p460 = pneg %p51
        $region66: #{tpu_custom_call.1} parent=63 // pred_check_branch
          %462 = sbr.rel (%p460) target = $region68
        $region67: #{tpu_custom_call.1} parent=63 // pred_region
          %s463 = sand.u32 %s41, 1
          %s464 = scalar_lea.sflag [#allocation3], %s463
          %s465 = sand.u32 %s41, 1
          %s466 = smul.addr %s465, 8
          %s467 = scalar_lea.vmem [#allocation2], %s466
          %s469 = ssub.s32 128, 128
          %470 = vsyncadd %s464, %s469
          %s471 = smul.addr %s31, 128
          %s472 = scalar_lea.hbm %s0, %s471
          %s474 = sshll.u32 %s467, 4
          %s475 = int_to_ptr.vmem [resolvable:$true] %s474
          %477 = dma.hbm_to_vmem [thread:$0]  %s472, 128, %s475, %s464
        $region68: #{tpu_custom_call.1} parent=63 // pred_fallthru
          _
        // Predicated region
        $region69: #{tpu_custom_call.1} parent=63 // pred_check
          %p478 = pneg %p77
        $region70: #{tpu_custom_call.1} parent=63 // pred_check_branch
          %480 = sbr.rel (%p478) target = $region72
        $region71: #{tpu_custom_call.1} parent=63 // pred_region
          %s481 = sand.u32 %s31, 1
          %s482 = scalar_lea.sflag [#allocation6], %s481
          %s483 = sand.u32 %s67, 1
          %s484 = smul.addr %s483, 8
          %s485 = scalar_lea.vmem [#allocation5], %s484
          %s487 = ssub.s32 128, 128
          %488 = vsyncadd %s482, %s487
          %s489 = smul.addr %s31, 128
          %s490 = scalar_lea.hbm %s1, %s489
          %s492 = sshll.u32 %s485, 4
          %s493 = int_to_ptr.vmem [resolvable:$true] %s492
          %495 = dma.hbm_to_vmem [thread:$0]  %s490, 128, %s493, %s482
        $region72: #{tpu_custom_call.1} parent=63 // pred_fallthru
          _
      $region64: #{tpu_custom_call.1} parent=5 // pred_fallthru
        _
      %p496 = scmp.le.s32.totalorder 1, %s31
      %p497 = scmp.lt.s32.totalorder %s31, 3
      %p498 = pnand %p496, %p497
      %p499 = pneg %p498
      // Predicated region
      $region73: #{tpu_custom_call.1} parent=5 // pred_check
        _
      $region74: #{tpu_custom_call.1} parent=5 // pred_check_branch
        %501 = sbr.rel (%p498) target = $region76
      $region75: #{tpu_custom_call.1} parent=5 // pred_region
        %s502 = ssub.s32 %s31, 1
        %s503 = sand.u32 %s44, 1
        %s504 = scalar_lea.sflag [#allocation3], %s503
        %s505 = sand.u32 %s44, 1
        %s506 = smul.addr %s505, 8
        %s507 = scalar_lea.vmem [#allocation2], %s506
        // Predicated region
        $region77: #{tpu_custom_call.1} parent=75 // pred_check
          %p508 = pneg %p57
        $region78: #{tpu_custom_call.1} parent=75 // pred_check_branch
          %510 = sbr.rel (%p508) target = $region80
        $region79: #{tpu_custom_call.1} parent=75 // pred_region
          %511 = dma.done %s504, 128
        $region80: #{tpu_custom_call.1} parent=75 // pred_fallthru
          _
        %s512 = sand.u32 %s36, 1
        %s513 = scalar_lea.sflag [#allocation6], %s512
        %s514 = sand.u32 %s70, 1
        %s515 = smul.addr %s514, 8
        %s516 = scalar_lea.vmem [#allocation5], %s515
        // Predicated region
        $region81: #{tpu_custom_call.1} parent=75 // pred_check
          %p517 = pneg %p83
        $region82: #{tpu_custom_call.1} parent=75 // pred_check_branch
          %519 = sbr.rel (%p517) target = $region84
        $region83: #{tpu_custom_call.1} parent=75 // pred_region
          %520 = dma.done %s513, 128
        $region84: #{tpu_custom_call.1} parent=75 // pred_fallthru
          _
        // Predicated region
        $region85: #{tpu_custom_call.1} parent=75 // pred_check
          %p521 = pneg %p167
        $region86: #{tpu_custom_call.1} parent=75 // pred_check_branch
          %523 = sbr.rel (%p521) target = $region88
        $region87: #{tpu_custom_call.1} parent=75 // pred_region
          %524 = dma.done [#allocation6], 16
        $region88: #{tpu_custom_call.1} parent=75 // pred_fallthru
          _
        // Predicated region
        $region89: #{tpu_custom_call.1} parent=75 // pred_check
          %p525 = pneg %p209
        $region90: #{tpu_custom_call.1} parent=75 // pred_check_branch
          %527 = sbr.rel (%p525) target = $region92
        $region91: #{tpu_custom_call.1} parent=75 // pred_region
          %528 = dma.done [#allocation9], 16
        $region92: #{tpu_custom_call.1} parent=75 // pred_fallthru
          _
        // Predicated region
        $region93: #{tpu_custom_call.1} parent=75 // pred_check
          %p529 = pneg %p251
        $region94: #{tpu_custom_call.1} parent=75 // pred_check_branch
          %531 = sbr.rel (%p529) target = $region96
        $region95: #{tpu_custom_call.1} parent=75 // pred_region
          %532 = dma.done [#allocation9], 128
        $region96: #{tpu_custom_call.1} parent=75 // pred_fallthru
          _
        // Predicated region
        $region97: #{tpu_custom_call.1} parent=75 // pred_check
          %p533 = pneg %p272
        $region98: #{tpu_custom_call.1} parent=75 // pred_check_branch
          %535 = sbr.rel (%p533) target = $region100
        $region99: #{tpu_custom_call.1} parent=75 // pred_region
          %536 = dma.done [#allocation12], 256
        $region100: #{tpu_custom_call.1} parent=75 // pred_fallthru
          _
        // Predicated region
        $region101: #{tpu_custom_call.1} parent=75 // pred_check
          %p537 = pneg %p293
        $region102: #{tpu_custom_call.1} parent=75 // pred_check_branch
          %539 = sbr.rel (%p537) target = $region104
        $region103: #{tpu_custom_call.1} parent=75 // pred_region
          %540 = dma.done [#allocation12], 256
        $region104: #{tpu_custom_call.1} parent=75 // pred_fallthru
          _
        %s541 = sand.u32 %s44, 1
        %s542 = scalar_lea.sflag [#allocation3], %s541
        %s543 = sand.u32 %s44, 1
        %s544 = smul.addr %s543, 8
        %s545 = scalar_lea.vmem [#allocation2], %s544
        %p546 = pneg %p57
        %p547 = pneg %p54
        %s548 = sand.u32 %s36, 1
        %s549 = scalar_lea.sflag [#allocation6], %s548
        %s550 = sand.u32 %s70, 1
        %s551 = smul.addr %s550, 8
        %s552 = scalar_lea.vmem [#allocation5], %s551
        %p553 = pneg %p83
        %p554 = pneg %p80
        %p555 = pneg %p104
        %p556 = pneg %p101
        %p557 = pneg %p125
        %p558 = pneg %p122
        %p559 = pneg %p146
        %p560 = pneg %p143
        %p561 = pneg %p167
        %p562 = pneg %p164
        %p563 = pneg %p188
        %p564 = pneg %p185
        %p565 = pneg %p209
        %p566 = pneg %p206
        %p567 = pneg %p230
        %p568 = pneg %p227
        %p569 = pneg %p251
        %p570 = pneg %p248
        %p571 = pneg %p272
        %p572 = pneg %p269
        %p573 = pneg %p293
        %p574 = pneg %p290
        %p575 = pneg %p314
        %p576 = pneg %p311
        %p577 = pneg %p335
        %p578 = pneg %p332
        %p579 = pneg %p361
        %p580 = pneg %p358
        %s581 = sand.u32 %s348, 1
        %s582 = scalar_lea.sflag [#allocation4], %s581
        %s583 = sand.u32 %s348, 1
        %s584 = scalar_lea.vmem [#allocation14], %s583
        %v585 = vld [vmem:[%s507] sm:$0xff]
        %v586 = vld [vmem:[%s516] sm:$0xff]
        %v587 = vld [vmem:[%s2] sm:$0xff]
        %v588 = vld [vmem:[%s2 + $0x8] sm:$0xff]
        %v589 = vld [vmem:[%s2 + $0x10] sm:$0xff]
        %v590 = vld [vmem:[%s2 + $0x18] sm:$0xff]
        %v591 = vld [vmem:[%s3] sm:$0x1]
        %v593 = vlaneseq
        %v594 = vshrl.u32 %v593, 7
        %v595 = vsub.s32 0, %v594
        %v596 = vrot.slane %v591, %v595
        %vm598 = vcmask 261120
        %v600 = vsel %vm598, %v585, 0
        %602 = vmatprep.subr.mxu0 0.0
        %603 = vmatpush1.msra.mxu0 %v587
        %604 = vmatprep.subr.mxu0 0.0
        %605 = vmatpush1.msra.mxu0 %v588
        %606 = vmatprep.subr.mxu0 0.0
        %607 = vmatpush1.msra.mxu0 %v589
        %608 = vmatprep.subr.mxu0 0.0
        %609 = vmatpush1.msra.mxu0 %v590
        %610 = vmatprep.subr.mxu0 0.0
        %611 = vmatpush1.msra.mxu0 0.0
        %612 = vmatprep.subr.mxu0 0.0
        %613 = vmatpush1.msra.mxu0 0.0
        %614 = vmatprep.subr.mxu0 0.0
        %615 = vmatpush1.msra.mxu0 0.0
        %616 = vmatprep.subr.mxu0 0.0
        %617 = vmatpush1.msra.mxu0 0.0
        %618 = vmatprep.subr.mxu0 0.0
        %619 = vmatpush1.msra.mxu0 0.0
        %620 = vmatprep.subr.mxu0 0.0
        %621 = vmatpush1.msra.mxu0 0.0
        %622 = vmatprep.subr.mxu0 0.0
        %623 = vmatpush1.msra.mxu0 0.0
        %624 = vmatprep.subr.mxu0 0.0
        %625 = vmatpush1.msra.mxu0 0.0
        %626 = vmatprep.subr.mxu0 0.0
        %627 = vmatpush1.msra.mxu0 0.0
        %628 = vmatprep.subr.mxu0 0.0
        %629 = vmatpush1.msra.mxu0 0.0
        %630 = vmatprep.subr.mxu0 0.0
        %631 = vmatpush1.msra.mxu0 0.0
        %632 = vmatprep.subr.mxu0 0.0
        %633 = vmatpush1.msra.mxu0 0.0
        %634 = vmatprep.subr.mxu0 0.0
        %635 = vmatpush1.msra.mxu0 0.0
        %636 = vmatprep.subr.mxu0 0.0
        %637 = vmatpush1.msra.mxu0 0.0
        %638 = vmatprep.subr.mxu0 0.0
        %639 = vmatpush1.msra.mxu0 0.0
        %640 = vmatprep.subr.mxu0 0.0
        %641 = vmatpush1.msra.mxu0 0.0
        %642 = vmatprep.subr.mxu0 0.0
        %643 = vmatpush1.msra.mxu0 0.0
        %644 = vmatprep.subr.mxu0 0.0
        %645 = vmatpush1.msra.mxu0 0.0
        %646 = vmatprep.subr.mxu0 0.0
        %647 = vmatpush1.msra.mxu0 0.0
        %648 = vmatprep.subr.mxu0 0.0
        %649 = vmatpush1.msra.mxu0 0.0
        %650 = vmatprep.subr.mxu0 0.0
        %651 = vmatpush1.msra.mxu0 0.0
        %652 = vmatprep.subr.mxu0 0.0
        %653 = vmatpush1.msra.mxu0 0.0
        %654 = vmatprep.subr.mxu0 0.0
        %655 = vmatpush1.msra.mxu0 0.0
        %656 = vmatprep.subr.mxu0 0.0
        %657 = vmatpush1.msra.mxu0 0.0
        %658 = vmatprep.subr.mxu0 0.0
        %659 = vmatpush1.msra.mxu0 0.0
        %660 = vmatprep.subr.mxu0 0.0
        %661 = vmatpush1.msra.mxu0 0.0
        %662 = vmatprep.subr.mxu0 0.0
        %663 = vmatpush1.msra.mxu0 0.0
        %664 = vmatprep.subr.mxu0 0.0
        %665 = vmatpush1.msra.mxu0 0.0
        %666 = vmatprep.mubr.f32.mxu0 0.0
        %667 = vmatmul.mubr.f32.gmra.mrb[0].mxu0 %v600
        %v668 = vpop.f32.mrb[0].mxu0
        %v669 = vadd.f32 %v596, %v668
        %v670 = vpop.f32.mrb[0].mxu0
        %671 = vdwg.mxu0
        %v672 = vld [vmem:[%s4] sm:$0xff]
        %v673 = vld [vmem:[%s4 + $0x8] sm:$0xff]
        %v674 = vld [vmem:[%s4 + $0x10] sm:$0xff]
        %v675 = vld [vmem:[%s4 + $0x18] sm:$0xff]
        %v676 = vld [vmem:[#allocation7] sm:$0x1]
        %v678 = vlaneseq
        %v679 = vshrl.u32 %v678, 7
        %v680 = vsub.s32 0, %v679
        %v681 = vrot.slane %v676, %v680
        %v684 = vsel %vm598, %v586, 0
        %686 = vmatprep.subr.mxu0 0.0
        %687 = vmatpush1.msra.mxu0 %v672
        %688 = vmatprep.subr.mxu0 0.0
        %689 = vmatpush1.msra.mxu0 %v673
        %690 = vmatprep.subr.mxu0 0.0
        %691 = vmatpush1.msra.mxu0 %v674
        %692 = vmatprep.subr.mxu0 0.0
        %693 = vmatpush1.msra.mxu0 %v675
        %694 = vmatprep.subr.mxu0 0.0
        %695 = vmatpush1.msra.mxu0 0.0
        %696 = vmatprep.subr.mxu0 0.0
        %697 = vmatpush1.msra.mxu0 0.0
        %698 = vmatprep.subr.mxu0 0.0
        %699 = vmatpush1.msra.mxu0 0.0
        %700 = vmatprep.subr.mxu0 0.0
        %701 = vmatpush1.msra.mxu0 0.0
        %702 = vmatprep.subr.mxu0 0.0
        %703 = vmatpush1.msra.mxu0 0.0
        %704 = vmatprep.subr.mxu0 0.0
        %705 = vmatpush1.msra.mxu0 0.0
        %706 = vmatprep.subr.mxu0 0.0
        %707 = vmatpush1.msra.mxu0 0.0
        %708 = vmatprep.subr.mxu0 0.0
        %709 = vmatpush1.msra.mxu0 0.0
        %710 = vmatprep.subr.mxu0 0.0
        %711 = vmatpush1.msra.mxu0 0.0
        %712 = vmatprep.subr.mxu0 0.0
        %713 = vmatpush1.msra.mxu0 0.0
        %714 = vmatprep.subr.mxu0 0.0
        %715 = vmatpush1.msra.mxu0 0.0
        %716 = vmatprep.subr.mxu0 0.0
        %717 = vmatpush1.msra.mxu0 0.0
        %718 = vmatprep.subr.mxu0 0.0
        %719 = vmatpush1.msra.mxu0 0.0
        %720 = vmatprep.subr.mxu0 0.0
        %721 = vmatpush1.msra.mxu0 0.0
        %722 = vmatprep.subr.mxu0 0.0
        %723 = vmatpush1.msra.mxu0 0.0
        %724 = vmatprep.subr.mxu0 0.0
        %725 = vmatpush1.msra.mxu0 0.0
        %726 = vmatprep.subr.mxu0 0.0
        %727 = vmatpush1.msra.mxu0 0.0
        %728 = vmatprep.subr.mxu0 0.0
        %729 = vmatpush1.msra.mxu0 0.0
        %730 = vmatprep.subr.mxu0 0.0
        %731 = vmatpush1.msra.mxu0 0.0
        %732 = vmatprep.subr.mxu0 0.0
        %733 = vmatpush1.msra.mxu0 0.0
        %734 = vmatprep.subr.mxu0 0.0
        %735 = vmatpush1.msra.mxu0 0.0
        %736 = vmatprep.subr.mxu0 0.0
        %737 = vmatpush1.msra.mxu0 0.0
        %738 = vmatprep.subr.mxu0 0.0
        %739 = vmatpush1.msra.mxu0 0.0
        %740 = vmatprep.subr.mxu0 0.0
        %741 = vmatpush1.msra.mxu0 0.0
        %742 = vmatprep.subr.mxu0 0.0
        %743 = vmatpush1.msra.mxu0 0.0
        %744 = vmatprep.subr.mxu0 0.0
        %745 = vmatpush1.msra.mxu0 0.0
        %746 = vmatprep.subr.mxu0 0.0
        %747 = vmatpush1.msra.mxu0 0.0
        %748 = vmatprep.subr.mxu0 0.0
        %749 = vmatpush1.msra.mxu0 0.0
        %750 = vmatprep.mubr.f32.mxu0 0.0
        %751 = vmatmul.mubr.f32.gmra.mrb[0].mxu0 %v684
        %v752 = vpop.f32.mrb[0].mxu0
        %v753 = vadd.f32 %v681, %v752
        %v754 = vpop.f32.mrb[0].mxu0
        %755 = vdwg.mxu0
        %v756 = vld [vmem:[%s8] sm:$0xff]
        %v757 = vld [vmem:[%s8 + $0x8] sm:$0xff]
        %v758 = vld [vmem:[%s8 + $0x10] sm:$0xff]
        %v759 = vld [vmem:[%s8 + $0x18] sm:$0xff]
        %v761 = vsel %vm598, %v669, 0
        %763 = vmatprep.subr.mxu0 0.0
        %764 = vmatpush1.msra.mxu0 %v756
        %765 = vmatprep.subr.mxu0 0.0
        %766 = vmatpush1.msra.mxu0 %v757
        %767 = vmatprep.subr.mxu0 0.0
        %768 = vmatpush1.msra.mxu0 %v758
        %769 = vmatprep.subr.mxu0 0.0
        %770 = vmatpush1.msra.mxu0 %v759
        %771 = vmatprep.subr.mxu0 0.0
        %772 = vmatpush1.msra.mxu0 0.0
        %773 = vmatprep.subr.mxu0 0.0
        %774 = vmatpush1.msra.mxu0 0.0
        %775 = vmatprep.subr.mxu0 0.0
        %776 = vmatpush1.msra.mxu0 0.0
        %777 = vmatprep.subr.mxu0 0.0
        %778 = vmatpush1.msra.mxu0 0.0
        %779 = vmatprep.subr.mxu0 0.0
        %780 = vmatpush1.msra.mxu0 0.0
        %781 = vmatprep.subr.mxu0 0.0
        %782 = vmatpush1.msra.mxu0 0.0
        %783 = vmatprep.subr.mxu0 0.0
        %784 = vmatpush1.msra.mxu0 0.0
        %785 = vmatprep.subr.mxu0 0.0
        %786 = vmatpush1.msra.mxu0 0.0
        %787 = vmatprep.subr.mxu0 0.0
        %788 = vmatpush1.msra.mxu0 0.0
        %789 = vmatprep.subr.mxu0 0.0
        %790 = vmatpush1.msra.mxu0 0.0
        %791 = vmatprep.subr.mxu0 0.0
        %792 = vmatpush1.msra.mxu0 0.0
        %793 = vmatprep.subr.mxu0 0.0
        %794 = vmatpush1.msra.mxu0 0.0
        %795 = vmatprep.subr.mxu0 0.0
        %796 = vmatpush1.msra.mxu0 0.0
        %797 = vmatprep.subr.mxu0 0.0
        %798 = vmatpush1.msra.mxu0 0.0
        %799 = vmatprep.subr.mxu0 0.0
        %800 = vmatpush1.msra.mxu0 0.0
        %801 = vmatprep.subr.mxu0 0.0
        %802 = vmatpush1.msra.mxu0 0.0
        %803 = vmatprep.subr.mxu0 0.0
        %804 = vmatpush1.msra.mxu0 0.0
        %805 = vmatprep.subr.mxu0 0.0
        %806 = vmatpush1.msra.mxu0 0.0
        %807 = vmatprep.subr.mxu0 0.0
        %808 = vmatpush1.msra.mxu0 0.0
        %809 = vmatprep.subr.mxu0 0.0
        %810 = vmatpush1.msra.mxu0 0.0
        %811 = vmatprep.subr.mxu0 0.0
        %812 = vmatpush1.msra.mxu0 0.0
        %813 = vmatprep.subr.mxu0 0.0
        %814 = vmatpush1.msra.mxu0 0.0
        %815 = vmatprep.subr.mxu0 0.0
        %816 = vmatpush1.msra.mxu0 0.0
        %817 = vmatprep.subr.mxu0 0.0
        %818 = vmatpush1.msra.mxu0 0.0
        %819 = vmatprep.subr.mxu0 0.0
        %820 = vmatpush1.msra.mxu0 0.0
        %821 = vmatprep.subr.mxu0 0.0
        %822 = vmatpush1.msra.mxu0 0.0
        %823 = vmatprep.subr.mxu0 0.0
        %824 = vmatpush1.msra.mxu0 0.0
        %825 = vmatprep.subr.mxu0 0.0
        %826 = vmatpush1.msra.mxu0 0.0
        %827 = vmatprep.mubr.f32.mxu0 0.0
        %828 = vmatmul.mubr.f32.gmra.mrb[0].mxu0 %v761
        %v829 = vpop.f32.mrb[0].mxu0
        %v830 = vadd.f32 0.0, %v829
        %v831 = vpop.f32.mrb[0].mxu0
        %832 = vdwg.mxu0
        %v833 = vld [vmem:[#allocation10] sm:$0xff]
        %vm834 = vcmp.gt.f32.partialorder %v833, 0.5
        %v835 = vsel %vm834, %v830, -inf
        %vm836 = vcmask 130048
        %v837 = vsel %vm836, %v835, -inf
        %838 = vmax.xlane.f32.xlu0 %v837
        %v839 = vpop.xlane.xlu0 %838
        %v840 = vrot.slane %v839, 4
        %v841 = vmax.f32 %v839, %v840
        %v842 = vrot.slane %v841, 2
        %v843 = vmax.f32 %v841, %v842
        %v844 = vrot.slane %v843, 1
        %v845 = vmax.f32 %v843, %v844
        %s846 = vtos %v845
        %v847 = vstv %s846
        %v848 = vsub.f32 %v835, %v847
        %v849 = vmul.f32 %v848, 1.442695
        %v850 = vpow.pop %v849
        %v851 = vsel %vm836, %v850, 0.0
        %v852 = vrot.slane %v851, 4
        %v853 = vadd.f32 %v851, %v852
        %v854 = vrot.slane %v853, 2
        %v855 = vadd.f32 %v853, %v854
        %v856 = vrot.slane %v855, 1
        %v857 = vadd.f32 %v855, %v856
        %v858 = vld [vmem:[#allocation11] sm:$0xff]
        %v859 = vld [vmem:[#allocation11 + $0x8] sm:$0xff]
        %v861 = vsel %vm836, %v857, 0
        %863 = vmatprep.subr.mxu0 0.0
        %864 = vmatpush1.msra.mxu0 %v858
        %865 = vmatprep.subr.mxu0 0.0
        %866 = vmatpush1.msra.mxu0 %v859
        %867 = vmatprep.subr.mxu0 0.0
        %868 = vmatpush1.msra.mxu0 0.0
        %869 = vmatprep.subr.mxu0 0.0
        %870 = vmatpush1.msra.mxu0 0.0
        %871 = vmatprep.subr.mxu0 0.0
        %872 = vmatpush1.msra.mxu0 0.0
        %873 = vmatprep.subr.mxu0 0.0
        %874 = vmatpush1.msra.mxu0 0.0
        %875 = vmatprep.subr.mxu0 0.0
        %876 = vmatpush1.msra.mxu0 0.0
        %877 = vmatprep.subr.mxu0 0.0
        %878 = vmatpush1.msra.mxu0 0.0
        %879 = vmatprep.subr.mxu0 0.0
        %880 = vmatpush1.msra.mxu0 0.0
        %881 = vmatprep.subr.mxu0 0.0
        %882 = vmatpush1.msra.mxu0 0.0
        %883 = vmatprep.subr.mxu0 0.0
        %884 = vmatpush1.msra.mxu0 0.0
        %885 = vmatprep.subr.mxu0 0.0
        %886 = vmatpush1.msra.mxu0 0.0
        %887 = vmatprep.subr.mxu0 0.0
        %888 = vmatpush1.msra.mxu0 0.0
        %889 = vmatprep.subr.mxu0 0.0
        %890 = vmatpush1.msra.mxu0 0.0
        %891 = vmatprep.subr.mxu0 0.0
        %892 = vmatpush1.msra.mxu0 0.0
        %893 = vmatprep.subr.mxu0 0.0
        %894 = vmatpush1.msra.mxu0 0.0
        %895 = vmatprep.subr.mxu0 0.0
        %896 = vmatpush1.msra.mxu0 0.0
        %897 = vmatprep.subr.mxu0 0.0
        %898 = vmatpush1.msra.mxu0 0.0
        %899 = vmatprep.subr.mxu0 0.0
        %900 = vmatpush1.msra.mxu0 0.0
        %901 = vmatprep.subr.mxu0 0.0
        %902 = vmatpush1.msra.mxu0 0.0
        %903 = vmatprep.subr.mxu0 0.0
        %904 = vmatpush1.msra.mxu0 0.0
        %905 = vmatprep.subr.mxu0 0.0
        %906 = vmatpush1.msra.mxu0 0.0
        %907 = vmatprep.subr.mxu0 0.0
        %908 = vmatpush1.msra.mxu0 0.0
        %909 = vmatprep.subr.mxu0 0.0
        %910 = vmatpush1.msra.mxu0 0.0
        %911 = vmatprep.subr.mxu0 0.0
        %912 = vmatpush1.msra.mxu0 0.0
        %913 = vmatprep.subr.mxu0 0.0
        %914 = vmatpush1.msra.mxu0 0.0
        %915 = vmatprep.subr.mxu0 0.0
        %916 = vmatpush1.msra.mxu0 0.0
        %917 = vmatprep.subr.mxu0 0.0
        %918 = vmatpush1.msra.mxu0 0.0
        %919 = vmatprep.subr.mxu0 0.0
        %920 = vmatpush1.msra.mxu0 0.0
        %921 = vmatprep.subr.mxu0 0.0
        %922 = vmatpush1.msra.mxu0 0.0
        %923 = vmatprep.subr.mxu0 0.0
        %924 = vmatpush1.msra.mxu0 0.0
        %925 = vmatprep.subr.mxu0 0.0
        %926 = vmatpush1.msra.mxu0 0.0
        %927 = vmatprep.mubr.f32.mxu0 0.0
        %928 = vmatmul.mubr.f32.gmra.mrb[0].mxu0 %v861
        %v929 = vpop.f32.mrb[0].mxu0
        %v930 = vadd.f32 0.0, %v929
        %v931 = vpop.f32.mrb[0].mxu0
        %932 = vdwg.mxu0
        %v933 = vrcp.pop %v930
        %v934 = vmul.f32 %v930, %v933
        %v935 = vsub.f32 2.0, %v934
        %v936 = vmul.f32 %v933, %v935
        %v937 = vlaneseq
        %v938 = vshrl.u32 %v937, 7
        %v939 = vsub.s32 0, %v938
        %v940 = vrot.slane %v936, %v939
        %v941 = vmul.f32 %v850, %v940
        %v942 = vld [vmem:[#allocation13] sm:$0xff]
        %v943 = vld [vmem:[#allocation13 + $0x8] sm:$0xff]
        %v945 = vsel %vm836, %v941, 0
        %947 = vmatprep.subr.mxu0 0.0
        %948 = vmatpush1.msra.mxu0 %v942
        %949 = vmatprep.subr.mxu0 0.0
        %950 = vmatpush1.msra.mxu0 %v943
        %951 = vmatprep.subr.mxu0 0.0
        %952 = vmatpush1.msra.mxu0 0.0
        %953 = vmatprep.subr.mxu0 0.0
        %954 = vmatpush1.msra.mxu0 0.0
        %955 = vmatprep.subr.mxu0 0.0
        %956 = vmatpush1.msra.mxu0 0.0
        %957 = vmatprep.subr.mxu0 0.0
        %958 = vmatpush1.msra.mxu0 0.0
        %959 = vmatprep.subr.mxu0 0.0
        %960 = vmatpush1.msra.mxu0 0.0
        %961 = vmatprep.subr.mxu0 0.0
        %962 = vmatpush1.msra.mxu0 0.0
        %963 = vmatprep.subr.mxu0 0.0
        %964 = vmatpush1.msra.mxu0 0.0
        %965 = vmatprep.subr.mxu0 0.0
        %966 = vmatpush1.msra.mxu0 0.0
        %967 = vmatprep.subr.mxu0 0.0
        %968 = vmatpush1.msra.mxu0 0.0
        %969 = vmatprep.subr.mxu0 0.0
        %970 = vmatpush1.msra.mxu0 0.0
        %971 = vmatprep.subr.mxu0 0.0
        %972 = vmatpush1.msra.mxu0 0.0
        %973 = vmatprep.subr.mxu0 0.0
        %974 = vmatpush1.msra.mxu0 0.0
        %975 = vmatprep.subr.mxu0 0.0
        %976 = vmatpush1.msra.mxu0 0.0
        %977 = vmatprep.subr.mxu0 0.0
        %978 = vmatpush1.msra.mxu0 0.0
        %979 = vmatprep.subr.mxu0 0.0
        %980 = vmatpush1.msra.mxu0 0.0
        %981 = vmatprep.subr.mxu0 0.0
        %982 = vmatpush1.msra.mxu0 0.0
        %983 = vmatprep.subr.mxu0 0.0
        %984 = vmatpush1.msra.mxu0 0.0
        %985 = vmatprep.subr.mxu0 0.0
        %986 = vmatpush1.msra.mxu0 0.0
        %987 = vmatprep.subr.mxu0 0.0
        %988 = vmatpush1.msra.mxu0 0.0
        %989 = vmatprep.subr.mxu0 0.0
        %990 = vmatpush1.msra.mxu0 0.0
        %991 = vmatprep.subr.mxu0 0.0
        %992 = vmatpush1.msra.mxu0 0.0
        %993 = vmatprep.subr.mxu0 0.0
        %994 = vmatpush1.msra.mxu0 0.0
        %995 = vmatprep.subr.mxu0 0.0
        %996 = vmatpush1.msra.mxu0 0.0
        %997 = vmatprep.subr.mxu0 0.0
        %998 = vmatpush1.msra.mxu0 0.0
        %999 = vmatprep.subr.mxu0 0.0
        %1000 = vmatpush1.msra.mxu0 0.0
        %1001 = vmatprep.subr.mxu0 0.0
        %1002 = vmatpush1.msra.mxu0 0.0
        %1003 = vmatprep.subr.mxu0 0.0
        %1004 = vmatpush1.msra.mxu0 0.0
        %1005 = vmatprep.subr.mxu0 0.0
        %1006 = vmatpush1.msra.mxu0 0.0
        %1007 = vmatprep.subr.mxu0 0.0
        %1008 = vmatpush1.msra.mxu0 0.0
        %1009 = vmatprep.subr.mxu0 0.0
        %1010 = vmatpush1.msra.mxu0 0.0
        %1011 = vmatprep.mubr.f32.mxu0 0.0
        %1012 = vmatmul.mubr.f32.gmra.mrb[0].mxu0 %v945
        %v1013 = vpop.f32.mrb[0].mxu0
        %v1014 = vadd.f32 0.0, %v1013
        %v1015 = vpop.f32.mrb[0].mxu0
        %1016 = vdwg.mxu0
        %v1017 = vmul.f32 %v1014, %v753
        %v1018 = vld [vmem:[#allocation8] sm:$0x1]
        %v1019 = vld [vmem:[%s12] sm:$0xff]
        %v1020 = vmul.f32 %v1017, %v1019
        %v1021 = vsel %vm598, %v1020, 0.0
        %v1022 = vrot.slane %v1021, 4
        %v1023 = vadd.f32 %v1021, %v1022
        %v1024 = vrot.slane %v1023, 2
        %v1025 = vadd.f32 %v1023, %v1024
        %v1026 = vrot.slane %v1025, 1
        %v1027 = vadd.f32 %v1025, %v1026
        %v1028 = vld [vmem:[%s13] sm:$0xff]
        %v1029 = vld [vmem:[%s13 + $0x8] sm:$0xff]
        %v1030 = vld [vmem:[%s13 + $0x10] sm:$0xff]
        %v1031 = vld [vmem:[%s13 + $0x18] sm:$0xff]
        %v1033 = vsel %vm598, %v1027, 0
        %1035 = vmatprep.subr.mxu0 0.0
        %1036 = vmatpush1.msra.mxu0 %v1028
        %1037 = vmatprep.subr.mxu0 0.0
        %1038 = vmatpush1.msra.mxu0 %v1029
        %1039 = vmatprep.subr.mxu0 0.0
        %1040 = vmatpush1.msra.mxu0 %v1030
        %1041 = vmatprep.subr.mxu0 0.0
        %1042 = vmatpush1.msra.mxu0 %v1031
        %1043 = vmatprep.subr.mxu0 0.0
        %1044 = vmatpush1.msra.mxu0 0.0
        %1045 = vmatprep.subr.mxu0 0.0
        %1046 = vmatpush1.msra.mxu0 0.0
        %1047 = vmatprep.subr.mxu0 0.0
        %1048 = vmatpush1.msra.mxu0 0.0
        %1049 = vmatprep.subr.mxu0 0.0
        %1050 = vmatpush1.msra.mxu0 0.0
        %1051 = vmatprep.subr.mxu0 0.0
        %1052 = vmatpush1.msra.mxu0 0.0
        %1053 = vmatprep.subr.mxu0 0.0
        %1054 = vmatpush1.msra.mxu0 0.0
        %1055 = vmatprep.subr.mxu0 0.0
        %1056 = vmatpush1.msra.mxu0 0.0
        %1057 = vmatprep.subr.mxu0 0.0
        %1058 = vmatpush1.msra.mxu0 0.0
        %1059 = vmatprep.subr.mxu0 0.0
        %1060 = vmatpush1.msra.mxu0 0.0
        %1061 = vmatprep.subr.mxu0 0.0
        %1062 = vmatpush1.msra.mxu0 0.0
        %1063 = vmatprep.subr.mxu0 0.0
        %1064 = vmatpush1.msra.mxu0 0.0
        %1065 = vmatprep.subr.mxu0 0.0
        %1066 = vmatpush1.msra.mxu0 0.0
        %1067 = vmatprep.subr.mxu0 0.0
        %1068 = vmatpush1.msra.mxu0 0.0
        %1069 = vmatprep.subr.mxu0 0.0
        %1070 = vmatpush1.msra.mxu0 0.0
        %1071 = vmatprep.subr.mxu0 0.0
        %1072 = vmatpush1.msra.mxu0 0.0
        %1073 = vmatprep.subr.mxu0 0.0
        %1074 = vmatpush1.msra.mxu0 0.0
        %1075 = vmatprep.subr.mxu0 0.0
        %1076 = vmatpush1.msra.mxu0 0.0
        %1077 = vmatprep.subr.mxu0 0.0
        %1078 = vmatpush1.msra.mxu0 0.0
        %1079 = vmatprep.subr.mxu0 0.0
        %1080 = vmatpush1.msra.mxu0 0.0
        %1081 = vmatprep.subr.mxu0 0.0
        %1082 = vmatpush1.msra.mxu0 0.0
        %1083 = vmatprep.subr.mxu0 0.0
        %1084 = vmatpush1.msra.mxu0 0.0
        %1085 = vmatprep.subr.mxu0 0.0
        %1086 = vmatpush1.msra.mxu0 0.0
        %1087 = vmatprep.subr.mxu0 0.0
        %1088 = vmatpush1.msra.mxu0 0.0
        %1089 = vmatprep.subr.mxu0 0.0
        %1090 = vmatpush1.msra.mxu0 0.0
        %1091 = vmatprep.subr.mxu0 0.0
        %1092 = vmatpush1.msra.mxu0 0.0
        %1093 = vmatprep.subr.mxu0 0.0
        %1094 = vmatpush1.msra.mxu0 0.0
        %1095 = vmatprep.subr.mxu0 0.0
        %1096 = vmatpush1.msra.mxu0 0.0
        %1097 = vmatprep.subr.mxu0 0.0
        %1098 = vmatpush1.msra.mxu0 0.0
        %1099 = vmatprep.mubr.f32.mxu0 0.0
        %1100 = vmatmul.mubr.f32.gmra.mrb[0].mxu0 %v1033
        %v1101 = vpop.f32.mrb[0].mxu0
        %v1102 = vadd.f32 0.0, %v1101
        %v1103 = vpop.f32.mrb[0].mxu0
        %1104 = vdwg.mxu0
        %v1105 = vld [vmem:[%s6] sm:$0xff]
        %vm1106 = vcmask 64512
        %v1108 = vsel %vm1106, %v1102, 0
        %1110 = vmatprep.subr.mxu0 0.0
        %1111 = vmatpush1.msra.mxu0 %v1105
        %1112 = vmatprep.subr.mxu0 0.0
        %1113 = vmatpush1.msra.mxu0 0.0
        %1114 = vmatprep.subr.mxu0 0.0
        %1115 = vmatpush1.msra.mxu0 0.0
        %1116 = vmatprep.subr.mxu0 0.0
        %1117 = vmatpush1.msra.mxu0 0.0
        %1118 = vmatprep.subr.mxu0 0.0
        %1119 = vmatpush1.msra.mxu0 0.0
        %1120 = vmatprep.subr.mxu0 0.0
        %1121 = vmatpush1.msra.mxu0 0.0
        %1122 = vmatprep.subr.mxu0 0.0
        %1123 = vmatpush1.msra.mxu0 0.0
        %1124 = vmatprep.subr.mxu0 0.0
        %1125 = vmatpush1.msra.mxu0 0.0
        %1126 = vmatprep.subr.mxu0 0.0
        %1127 = vmatpush1.msra.mxu0 0.0
        %1128 = vmatprep.subr.mxu0 0.0
        %1129 = vmatpush1.msra.mxu0 0.0
        %1130 = vmatprep.subr.mxu0 0.0
        %1131 = vmatpush1.msra.mxu0 0.0
        %1132 = vmatprep.subr.mxu0 0.0
        %1133 = vmatpush1.msra.mxu0 0.0
        %1134 = vmatprep.subr.mxu0 0.0
        %1135 = vmatpush1.msra.mxu0 0.0
        %1136 = vmatprep.subr.mxu0 0.0
        %1137 = vmatpush1.msra.mxu0 0.0
        %1138 = vmatprep.subr.mxu0 0.0
        %1139 = vmatpush1.msra.mxu0 0.0
        %1140 = vmatprep.subr.mxu0 0.0
        %1141 = vmatpush1.msra.mxu0 0.0
        %1142 = vmatprep.subr.mxu0 0.0
        %1143 = vmatpush1.msra.mxu0 0.0
        %1144 = vmatprep.subr.mxu0 0.0
        %1145 = vmatpush1.msra.mxu0 0.0
        %1146 = vmatprep.subr.mxu0 0.0
        %1147 = vmatpush1.msra.mxu0 0.0
        %1148 = vmatprep.subr.mxu0 0.0
        %1149 = vmatpush1.msra.mxu0 0.0
        %1150 = vmatprep.subr.mxu0 0.0
        %1151 = vmatpush1.msra.mxu0 0.0
        %1152 = vmatprep.subr.mxu0 0.0
        %1153 = vmatpush1.msra.mxu0 0.0
        %1154 = vmatprep.subr.mxu0 0.0
        %1155 = vmatpush1.msra.mxu0 0.0
        %1156 = vmatprep.subr.mxu0 0.0
        %1157 = vmatpush1.msra.mxu0 0.0
        %1158 = vmatprep.subr.mxu0 0.0
        %1159 = vmatpush1.msra.mxu0 0.0
        %1160 = vmatprep.subr.mxu0 0.0
        %1161 = vmatpush1.msra.mxu0 0.0
        %1162 = vmatprep.subr.mxu0 0.0
        %1163 = vmatpush1.msra.mxu0 0.0
        %1164 = vmatprep.subr.mxu0 0.0
        %1165 = vmatpush1.msra.mxu0 0.0
        %1166 = vmatprep.subr.mxu0 0.0
        %1167 = vmatpush1.msra.mxu0 0.0
        %1168 = vmatprep.subr.mxu0 0.0
        %1169 = vmatpush1.msra.mxu0 0.0
        %1170 = vmatprep.subr.mxu0 0.0
        %1171 = vmatpush1.msra.mxu0 0.0
        %1172 = vmatprep.subr.mxu0 0.0
        %1173 = vmatpush1.msra.mxu0 0.0
        %1174 = vmatprep.mubr.f32.mxu0 0.0
        %1175 = vmatmul.mubr.f32.gmra.mrb[0].mxu0 %v1108
        %v1176 = vpop.f32.mrb[0].mxu0
        %v1177 = vadd.f32 0.0, %v1176
        %v1178 = vpop.f32.mrb[0].mxu0
        %1179 = vdwg.mxu0
        %v1180 = vadd.f32 %v1018, %v1177
        %s1181 = scalar_lea.vmem %s12, 8
        %v1182 = vld [vmem:[%s1181] sm:$0xff]
        %v1183 = vmul.f32 %v1017, %v1182
        %v1184 = vsel %vm598, %v1183, 0.0
        %v1185 = vrot.slane %v1184, 4
        %v1186 = vadd.f32 %v1184, %v1185
        %v1187 = vrot.slane %v1186, 2
        %v1188 = vadd.f32 %v1186, %v1187
        %v1189 = vrot.slane %v1188, 1
        %v1190 = vadd.f32 %v1188, %v1189
        %v1192 = vsel %vm598, %v1190, 0
        %1194 = vmatprep.subr.mxu0 0.0
        %1195 = vmatpush1.msra.mxu0 %v1028
        %1196 = vmatprep.subr.mxu0 0.0
        %1197 = vmatpush1.msra.mxu0 %v1029
        %1198 = vmatprep.subr.mxu0 0.0
        %1199 = vmatpush1.msra.mxu0 %v1030
        %1200 = vmatprep.subr.mxu0 0.0
        %1201 = vmatpush1.msra.mxu0 %v1031
        %1202 = vmatprep.subr.mxu0 0.0
        %1203 = vmatpush1.msra.mxu0 0.0
        %1204 = vmatprep.subr.mxu0 0.0
        %1205 = vmatpush1.msra.mxu0 0.0
        %1206 = vmatprep.subr.mxu0 0.0
        %1207 = vmatpush1.msra.mxu0 0.0
        %1208 = vmatprep.subr.mxu0 0.0
        %1209 = vmatpush1.msra.mxu0 0.0
        %1210 = vmatprep.subr.mxu0 0.0
        %1211 = vmatpush1.msra.mxu0 0.0
        %1212 = vmatprep.subr.mxu0 0.0
        %1213 = vmatpush1.msra.mxu0 0.0
        %1214 = vmatprep.subr.mxu0 0.0
        %1215 = vmatpush1.msra.mxu0 0.0
        %1216 = vmatprep.subr.mxu0 0.0
        %1217 = vmatpush1.msra.mxu0 0.0
        %1218 = vmatprep.subr.mxu0 0.0
        %1219 = vmatpush1.msra.mxu0 0.0
        %1220 = vmatprep.subr.mxu0 0.0
        %1221 = vmatpush1.msra.mxu0 0.0
        %1222 = vmatprep.subr.mxu0 0.0
        %1223 = vmatpush1.msra.mxu0 0.0
        %1224 = vmatprep.subr.mxu0 0.0
        %1225 = vmatpush1.msra.mxu0 0.0
        %1226 = vmatprep.subr.mxu0 0.0
        %1227 = vmatpush1.msra.mxu0 0.0
        %1228 = vmatprep.subr.mxu0 0.0
        %1229 = vmatpush1.msra.mxu0 0.0
        %1230 = vmatprep.subr.mxu0 0.0
        %1231 = vmatpush1.msra.mxu0 0.0
        %1232 = vmatprep.subr.mxu0 0.0
        %1233 = vmatpush1.msra.mxu0 0.0
        %1234 = vmatprep.subr.mxu0 0.0
        %1235 = vmatpush1.msra.mxu0 0.0
        %1236 = vmatprep.subr.mxu0 0.0
        %1237 = vmatpush1.msra.mxu0 0.0
        %1238 = vmatprep.subr.mxu0 0.0
        %1239 = vmatpush1.msra.mxu0 0.0
        %1240 = vmatprep.subr.mxu0 0.0
        %1241 = vmatpush1.msra.mxu0 0.0
        %1242 = vmatprep.subr.mxu0 0.0
        %1243 = vmatpush1.msra.mxu0 0.0
        %1244 = vmatprep.subr.mxu0 0.0
        %1245 = vmatpush1.msra.mxu0 0.0
        %1246 = vmatprep.subr.mxu0 0.0
        %1247 = vmatpush1.msra.mxu0 0.0
        %1248 = vmatprep.subr.mxu0 0.0
        %1249 = vmatpush1.msra.mxu0 0.0
        %1250 = vmatprep.subr.mxu0 0.0
        %1251 = vmatpush1.msra.mxu0 0.0
        %1252 = vmatprep.subr.mxu0 0.0
        %1253 = vmatpush1.msra.mxu0 0.0
        %1254 = vmatprep.subr.mxu0 0.0
        %1255 = vmatpush1.msra.mxu0 0.0
        %1256 = vmatprep.subr.mxu0 0.0
        %1257 = vmatpush1.msra.mxu0 0.0
        %1258 = vmatprep.mubr.f32.mxu0 0.0
        %1259 = vmatmul.mubr.f32.gmra.mrb[0].mxu0 %v1192
        %v1260 = vpop.f32.mrb[0].mxu0
        %v1261 = vadd.f32 0.0, %v1260
        %v1262 = vpop.f32.mrb[0].mxu0
        %1263 = vdwg.mxu0
        %v1264 = vld [vmem:[%s6 + $0x8] sm:$0xff]
        %v1266 = vsel %vm1106, %v1261, 0
        %1268 = vmatprep.subr.mxu0 0.0
        %1269 = vmatpush1.msra.mxu0 %v1264
        %1270 = vmatprep.subr.mxu0 0.0
        %1271 = vmatpush1.msra.mxu0 0.0
        %1272 = vmatprep.subr.mxu0 0.0
        %1273 = vmatpush1.msra.mxu0 0.0
        %1274 = vmatprep.subr.mxu0 0.0
        %1275 = vmatpush1.msra.mxu0 0.0
        %1276 = vmatprep.subr.mxu0 0.0
        %1277 = vmatpush1.msra.mxu0 0.0
        %1278 = vmatprep.subr.mxu0 0.0
        %1279 = vmatpush1.msra.mxu0 0.0
        %1280 = vmatprep.subr.mxu0 0.0
        %1281 = vmatpush1.msra.mxu0 0.0
        %1282 = vmatprep.subr.mxu0 0.0
        %1283 = vmatpush1.msra.mxu0 0.0
        %1284 = vmatprep.subr.mxu0 0.0
        %1285 = vmatpush1.msra.mxu0 0.0
        %1286 = vmatprep.subr.mxu0 0.0
        %1287 = vmatpush1.msra.mxu0 0.0
        %1288 = vmatprep.subr.mxu0 0.0
        %1289 = vmatpush1.msra.mxu0 0.0
        %1290 = vmatprep.subr.mxu0 0.0
        %1291 = vmatpush1.msra.mxu0 0.0
        %1292 = vmatprep.subr.mxu0 0.0
        %1293 = vmatpush1.msra.mxu0 0.0
        %1294 = vmatprep.subr.mxu0 0.0
        %1295 = vmatpush1.msra.mxu0 0.0
        %1296 = vmatprep.subr.mxu0 0.0
        %1297 = vmatpush1.msra.mxu0 0.0
        %1298 = vmatprep.subr.mxu0 0.0
        %1299 = vmatpush1.msra.mxu0 0.0
        %1300 = vmatprep.subr.mxu0 0.0
        %1301 = vmatpush1.msra.mxu0 0.0
        %1302 = vmatprep.subr.mxu0 0.0
        %1303 = vmatpush1.msra.mxu0 0.0
        %1304 = vmatprep.subr.mxu0 0.0
        %1305 = vmatpush1.msra.mxu0 0.0
        %1306 = vmatprep.subr.mxu0 0.0
        %1307 = vmatpush1.msra.mxu0 0.0
        %1308 = vmatprep.subr.mxu0 0.0
        %1309 = vmatpush1.msra.mxu0 0.0
        %1310 = vmatprep.subr.mxu0 0.0
        %1311 = vmatpush1.msra.mxu0 0.0
        %1312 = vmatprep.subr.mxu0 0.0
        %1313 = vmatpush1.msra.mxu0 0.0
        %1314 = vmatprep.subr.mxu0 0.0
        %1315 = vmatpush1.msra.mxu0 0.0
        %1316 = vmatprep.subr.mxu0 0.0
        %1317 = vmatpush1.msra.mxu0 0.0
        %1318 = vmatprep.subr.mxu0 0.0
        %1319 = vmatpush1.msra.mxu0 0.0
        %1320 = vmatprep.subr.mxu0 0.0
        %1321 = vmatpush1.msra.mxu0 0.0
        %1322 = vmatprep.subr.mxu0 0.0
        %1323 = vmatpush1.msra.mxu0 0.0
        %1324 = vmatprep.subr.mxu0 0.0
        %1325 = vmatpush1.msra.mxu0 0.0
        %1326 = vmatprep.subr.mxu0 0.0
        %1327 = vmatpush1.msra.mxu0 0.0
        %1328 = vmatprep.subr.mxu0 0.0
        %1329 = vmatpush1.msra.mxu0 0.0
        %1330 = vmatprep.subr.mxu0 0.0
        %1331 = vmatpush1.msra.mxu0 0.0
        %1332 = vmatprep.mubr.f32.mxu0 0.0
        %1333 = vmatmul.mubr.f32.gmra.mrb[0].mxu0 %v1266
        %v1334 = vpop.f32.mrb[0].mxu0
        %v1335 = vadd.f32 0.0, %v1334
        %v1336 = vpop.f32.mrb[0].mxu0
        %1337 = vdwg.mxu0
        %v1338 = vadd.f32 %v1180, %v1335
        %s1339 = scalar_lea.vmem %s12, 16
        %v1340 = vld [vmem:[%s1339] sm:$0xff]
        %v1341 = vmul.f32 %v1017, %v1340
        %v1342 = vsel %vm598, %v1341, 0.0
        %v1343 = vrot.slane %v1342, 4
        %v1344 = vadd.f32 %v1342, %v1343
        %v1345 = vrot.slane %v1344, 2
        %v1346 = vadd.f32 %v1344, %v1345
        %v1347 = vrot.slane %v1346, 1
        %v1348 = vadd.f32 %v1346, %v1347
        %v1350 = vsel %vm598, %v1348, 0
        %1352 = vmatprep.subr.mxu0 0.0
        %1353 = vmatpush1.msra.mxu0 %v1028
        %1354 = vmatprep.subr.mxu0 0.0
        %1355 = vmatpush1.msra.mxu0 %v1029
        %1356 = vmatprep.subr.mxu0 0.0
        %1357 = vmatpush1.msra.mxu0 %v1030
        %1358 = vmatprep.subr.mxu0 0.0
        %1359 = vmatpush1.msra.mxu0 %v1031
        %1360 = vmatprep.subr.mxu0 0.0
        %1361 = vmatpush1.msra.mxu0 0.0
        %1362 = vmatprep.subr.mxu0 0.0
        %1363 = vmatpush1.msra.mxu0 0.0
        %1364 = vmatprep.subr.mxu0 0.0
        %1365 = vmatpush1.msra.mxu0 0.0
        %1366 = vmatprep.subr.mxu0 0.0
        %1367 = vmatpush1.msra.mxu0 0.0
        %1368 = vmatprep.subr.mxu0 0.0
        %1369 = vmatpush1.msra.mxu0 0.0
        %1370 = vmatprep.subr.mxu0 0.0
        %1371 = vmatpush1.msra.mxu0 0.0
        %1372 = vmatprep.subr.mxu0 0.0
        %1373 = vmatpush1.msra.mxu0 0.0
        %1374 = vmatprep.subr.mxu0 0.0
        %1375 = vmatpush1.msra.mxu0 0.0
        %1376 = vmatprep.subr.mxu0 0.0
        %1377 = vmatpush1.msra.mxu0 0.0
        %1378 = vmatprep.subr.mxu0 0.0
        %1379 = vmatpush1.msra.mxu0 0.0
        %1380 = vmatprep.subr.mxu0 0.0
        %1381 = vmatpush1.msra.mxu0 0.0
        %1382 = vmatprep.subr.mxu0 0.0
        %1383 = vmatpush1.msra.mxu0 0.0
        %1384 = vmatprep.subr.mxu0 0.0
        %1385 = vmatpush1.msra.mxu0 0.0
        %1386 = vmatprep.subr.mxu0 0.0
        %1387 = vmatpush1.msra.mxu0 0.0
        %1388 = vmatprep.subr.mxu0 0.0
        %1389 = vmatpush1.msra.mxu0 0.0
        %1390 = vmatprep.subr.mxu0 0.0
        %1391 = vmatpush1.msra.mxu0 0.0
        %1392 = vmatprep.subr.mxu0 0.0
        %1393 = vmatpush1.msra.mxu0 0.0
        %1394 = vmatprep.subr.mxu0 0.0
        %1395 = vmatpush1.msra.mxu0 0.0
        %1396 = vmatprep.subr.mxu0 0.0
        %1397 = vmatpush1.msra.mxu0 0.0
        %1398 = vmatprep.subr.mxu0 0.0
        %1399 = vmatpush1.msra.mxu0 0.0
        %1400 = vmatprep.subr.mxu0 0.0
        %1401 = vmatpush1.msra.mxu0 0.0
        %1402 = vmatprep.subr.mxu0 0.0
        %1403 = vmatpush1.msra.mxu0 0.0
        %1404 = vmatprep.subr.mxu0 0.0
        %1405 = vmatpush1.msra.mxu0 0.0
        %1406 = vmatprep.subr.mxu0 0.0
        %1407 = vmatpush1.msra.mxu0 0.0
        %1408 = vmatprep.subr.mxu0 0.0
        %1409 = vmatpush1.msra.mxu0 0.0
        %1410 = vmatprep.subr.mxu0 0.0
        %1411 = vmatpush1.msra.mxu0 0.0
        %1412 = vmatprep.subr.mxu0 0.0
        %1413 = vmatpush1.msra.mxu0 0.0
        %1414 = vmatprep.subr.mxu0 0.0
        %1415 = vmatpush1.msra.mxu0 0.0
        %1416 = vmatprep.mubr.f32.mxu0 0.0
        %1417 = vmatmul.mubr.f32.gmra.mrb[0].mxu0 %v1350
        %v1418 = vpop.f32.mrb[0].mxu0
        %v1419 = vadd.f32 0.0, %v1418
        %v1420 = vpop.f32.mrb[0].mxu0
        %1421 = vdwg.mxu0
        %v1422 = vld [vmem:[%s6 + $0x10] sm:$0xff]
        %v1424 = vsel %vm1106, %v1419, 0
        %1426 = vmatprep.subr.mxu0 0.0
        %1427 = vmatpush1.msra.mxu0 %v1422
        %1428 = vmatprep.subr.mxu0 0.0
        %1429 = vmatpush1.msra.mxu0 0.0
        %1430 = vmatprep.subr.mxu0 0.0
        %1431 = vmatpush1.msra.mxu0 0.0
        %1432 = vmatprep.subr.mxu0 0.0
        %1433 = vmatpush1.msra.mxu0 0.0
        %1434 = vmatprep.subr.mxu0 0.0
        %1435 = vmatpush1.msra.mxu0 0.0
        %1436 = vmatprep.subr.mxu0 0.0
        %1437 = vmatpush1.msra.mxu0 0.0
        %1438 = vmatprep.subr.mxu0 0.0
        %1439 = vmatpush1.msra.mxu0 0.0
        %1440 = vmatprep.subr.mxu0 0.0
        %1441 = vmatpush1.msra.mxu0 0.0
        %1442 = vmatprep.subr.mxu0 0.0
        %1443 = vmatpush1.msra.mxu0 0.0
        %1444 = vmatprep.subr.mxu0 0.0
        %1445 = vmatpush1.msra.mxu0 0.0
        %1446 = vmatprep.subr.mxu0 0.0
        %1447 = vmatpush1.msra.mxu0 0.0
        %1448 = vmatprep.subr.mxu0 0.0
        %1449 = vmatpush1.msra.mxu0 0.0
        %1450 = vmatprep.subr.mxu0 0.0
        %1451 = vmatpush1.msra.mxu0 0.0
        %1452 = vmatprep.subr.mxu0 0.0
        %1453 = vmatpush1.msra.mxu0 0.0
        %1454 = vmatprep.subr.mxu0 0.0
        %1455 = vmatpush1.msra.mxu0 0.0
        %1456 = vmatprep.subr.mxu0 0.0
        %1457 = vmatpush1.msra.mxu0 0.0
        %1458 = vmatprep.subr.mxu0 0.0
        %1459 = vmatpush1.msra.mxu0 0.0
        %1460 = vmatprep.subr.mxu0 0.0
        %1461 = vmatpush1.msra.mxu0 0.0
        %1462 = vmatprep.subr.mxu0 0.0
        %1463 = vmatpush1.msra.mxu0 0.0
        %1464 = vmatprep.subr.mxu0 0.0
        %1465 = vmatpush1.msra.mxu0 0.0
        %1466 = vmatprep.subr.mxu0 0.0
        %1467 = vmatpush1.msra.mxu0 0.0
        %1468 = vmatprep.subr.mxu0 0.0
        %1469 = vmatpush1.msra.mxu0 0.0
        %1470 = vmatprep.subr.mxu0 0.0
        %1471 = vmatpush1.msra.mxu0 0.0
        %1472 = vmatprep.subr.mxu0 0.0
        %1473 = vmatpush1.msra.mxu0 0.0
        %1474 = vmatprep.subr.mxu0 0.0
        %1475 = vmatpush1.msra.mxu0 0.0
        %1476 = vmatprep.subr.mxu0 0.0
        %1477 = vmatpush1.msra.mxu0 0.0
        %1478 = vmatprep.subr.mxu0 0.0
        %1479 = vmatpush1.msra.mxu0 0.0
        %1480 = vmatprep.subr.mxu0 0.0
        %1481 = vmatpush1.msra.mxu0 0.0
        %1482 = vmatprep.subr.mxu0 0.0
        %1483 = vmatpush1.msra.mxu0 0.0
        %1484 = vmatprep.subr.mxu0 0.0
        %1485 = vmatpush1.msra.mxu0 0.0
        %1486 = vmatprep.subr.mxu0 0.0
        %1487 = vmatpush1.msra.mxu0 0.0
        %1488 = vmatprep.subr.mxu0 0.0
        %1489 = vmatpush1.msra.mxu0 0.0
        %1490 = vmatprep.mubr.f32.mxu0 0.0
        %1491 = vmatmul.mubr.f32.gmra.mrb[0].mxu0 %v1424
        %v1492 = vpop.f32.mrb[0].mxu0
        %v1493 = vadd.f32 0.0, %v1492
        %v1494 = vpop.f32.mrb[0].mxu0
        %1495 = vdwg.mxu0
        %v1496 = vadd.f32 %v1338, %v1493
        %s1497 = scalar_lea.vmem %s12, 24
        %v1498 = vld [vmem:[%s1497] sm:$0xff]
        %v1499 = vmul.f32 %v1017, %v1498
        %v1500 = vsel %vm598, %v1499, 0.0
        %v1501 = vrot.slane %v1500, 4
        %v1502 = vadd.f32 %v1500, %v1501
        %v1503 = vrot.slane %v1502, 2
        %v1504 = vadd.f32 %v1502, %v1503
        %v1505 = vrot.slane %v1504, 1
        %v1506 = vadd.f32 %v1504, %v1505
        %v1508 = vsel %vm598, %v1506, 0
        %1510 = vmatprep.subr.mxu0 0.0
        %1511 = vmatpush1.msra.mxu0 %v1028
        %1512 = vmatprep.subr.mxu0 0.0
        %1513 = vmatpush1.msra.mxu0 %v1029
        %1514 = vmatprep.subr.mxu0 0.0
        %1515 = vmatpush1.msra.mxu0 %v1030
        %1516 = vmatprep.subr.mxu0 0.0
        %1517 = vmatpush1.msra.mxu0 %v1031
        %1518 = vmatprep.subr.mxu0 0.0
        %1519 = vmatpush1.msra.mxu0 0.0
        %1520 = vmatprep.subr.mxu0 0.0
        %1521 = vmatpush1.msra.mxu0 0.0
        %1522 = vmatprep.subr.mxu0 0.0
        %1523 = vmatpush1.msra.mxu0 0.0
        %1524 = vmatprep.subr.mxu0 0.0
        %1525 = vmatpush1.msra.mxu0 0.0
        %1526 = vmatprep.subr.mxu0 0.0
        %1527 = vmatpush1.msra.mxu0 0.0
        %1528 = vmatprep.subr.mxu0 0.0
        %1529 = vmatpush1.msra.mxu0 0.0
        %1530 = vmatprep.subr.mxu0 0.0
        %1531 = vmatpush1.msra.mxu0 0.0
        %1532 = vmatprep.subr.mxu0 0.0
        %1533 = vmatpush1.msra.mxu0 0.0
        %1534 = vmatprep.subr.mxu0 0.0
        %1535 = vmatpush1.msra.mxu0 0.0
        %1536 = vmatprep.subr.mxu0 0.0
        %1537 = vmatpush1.msra.mxu0 0.0
        %1538 = vmatprep.subr.mxu0 0.0
        %1539 = vmatpush1.msra.mxu0 0.0
        %1540 = vmatprep.subr.mxu0 0.0
        %1541 = vmatpush1.msra.mxu0 0.0
        %1542 = vmatprep.subr.mxu0 0.0
        %1543 = vmatpush1.msra.mxu0 0.0
        %1544 = vmatprep.subr.mxu0 0.0
        %1545 = vmatpush1.msra.mxu0 0.0
        %1546 = vmatprep.subr.mxu0 0.0
        %1547 = vmatpush1.msra.mxu0 0.0
        %1548 = vmatprep.subr.mxu0 0.0
        %1549 = vmatpush1.msra.mxu0 0.0
        %1550 = vmatprep.subr.mxu0 0.0
        %1551 = vmatpush1.msra.mxu0 0.0
        %1552 = vmatprep.subr.mxu0 0.0
        %1553 = vmatpush1.msra.mxu0 0.0
        %1554 = vmatprep.subr.mxu0 0.0
        %1555 = vmatpush1.msra.mxu0 0.0
        %1556 = vmatprep.subr.mxu0 0.0
        %1557 = vmatpush1.msra.mxu0 0.0
        %1558 = vmatprep.subr.mxu0 0.0
        %1559 = vmatpush1.msra.mxu0 0.0
        %1560 = vmatprep.subr.mxu0 0.0
        %1561 = vmatpush1.msra.mxu0 0.0
        %1562 = vmatprep.subr.mxu0 0.0
        %1563 = vmatpush1.msra.mxu0 0.0
        %1564 = vmatprep.subr.mxu0 0.0
        %1565 = vmatpush1.msra.mxu0 0.0
        %1566 = vmatprep.subr.mxu0 0.0
        %1567 = vmatpush1.msra.mxu0 0.0
        %1568 = vmatprep.subr.mxu0 0.0
        %1569 = vmatpush1.msra.mxu0 0.0
        %1570 = vmatprep.subr.mxu0 0.0
        %1571 = vmatpush1.msra.mxu0 0.0
        %1572 = vmatprep.subr.mxu0 0.0
        %1573 = vmatpush1.msra.mxu0 0.0
        %1574 = vmatprep.mubr.f32.mxu0 0.0
        %1575 = vmatmul.mubr.f32.gmra.mrb[0].mxu0 %v1508
        %v1576 = vpop.f32.mrb[0].mxu0
        %v1577 = vadd.f32 0.0, %v1576
        %v1578 = vpop.f32.mrb[0].mxu0
        %1579 = vdwg.mxu0
        %v1580 = vld [vmem:[%s6 + $0x18] sm:$0xff]
        %v1582 = vsel %vm1106, %v1577, 0
        %1584 = vmatprep.subr.mxu0 0.0
        %1585 = vmatpush1.msra.mxu0 %v1580
        %1586 = vmatprep.subr.mxu0 0.0
        %1587 = vmatpush1.msra.mxu0 0.0
        %1588 = vmatprep.subr.mxu0 0.0
        %1589 = vmatpush1.msra.mxu0 0.0
        %1590 = vmatprep.subr.mxu0 0.0
        %1591 = vmatpush1.msra.mxu0 0.0
        %1592 = vmatprep.subr.mxu0 0.0
        %1593 = vmatpush1.msra.mxu0 0.0
        %1594 = vmatprep.subr.mxu0 0.0
        %1595 = vmatpush1.msra.mxu0 0.0
        %1596 = vmatprep.subr.mxu0 0.0
        %1597 = vmatpush1.msra.mxu0 0.0
        %1598 = vmatprep.subr.mxu0 0.0
        %1599 = vmatpush1.msra.mxu0 0.0
        %1600 = vmatprep.subr.mxu0 0.0
        %1601 = vmatpush1.msra.mxu0 0.0
        %1602 = vmatprep.subr.mxu0 0.0
        %1603 = vmatpush1.msra.mxu0 0.0
        %1604 = vmatprep.subr.mxu0 0.0
        %1605 = vmatpush1.msra.mxu0 0.0
        %1606 = vmatprep.subr.mxu0 0.0
        %1607 = vmatpush1.msra.mxu0 0.0
        %1608 = vmatprep.subr.mxu0 0.0
        %1609 = vmatpush1.msra.mxu0 0.0
        %1610 = vmatprep.subr.mxu0 0.0
        %1611 = vmatpush1.msra.mxu0 0.0
        %1612 = vmatprep.subr.mxu0 0.0
        %1613 = vmatpush1.msra.mxu0 0.0
        %1614 = vmatprep.subr.mxu0 0.0
        %1615 = vmatpush1.msra.mxu0 0.0
        %1616 = vmatprep.subr.mxu0 0.0
        %1617 = vmatpush1.msra.mxu0 0.0
        %1618 = vmatprep.subr.mxu0 0.0
        %1619 = vmatpush1.msra.mxu0 0.0
        %1620 = vmatprep.subr.mxu0 0.0
        %1621 = vmatpush1.msra.mxu0 0.0
        %1622 = vmatprep.subr.mxu0 0.0
        %1623 = vmatpush1.msra.mxu0 0.0
        %1624 = vmatprep.subr.mxu0 0.0
        %1625 = vmatpush1.msra.mxu0 0.0
        %1626 = vmatprep.subr.mxu0 0.0
        %1627 = vmatpush1.msra.mxu0 0.0
        %1628 = vmatprep.subr.mxu0 0.0
        %1629 = vmatpush1.msra.mxu0 0.0
        %1630 = vmatprep.subr.mxu0 0.0
        %1631 = vmatpush1.msra.mxu0 0.0
        %1632 = vmatprep.subr.mxu0 0.0
        %1633 = vmatpush1.msra.mxu0 0.0
        %1634 = vmatprep.subr.mxu0 0.0
        %1635 = vmatpush1.msra.mxu0 0.0
        %1636 = vmatprep.subr.mxu0 0.0
        %1637 = vmatpush1.msra.mxu0 0.0
        %1638 = vmatprep.subr.mxu0 0.0
        %1639 = vmatpush1.msra.mxu0 0.0
        %1640 = vmatprep.subr.mxu0 0.0
        %1641 = vmatpush1.msra.mxu0 0.0
        %1642 = vmatprep.subr.mxu0 0.0
        %1643 = vmatpush1.msra.mxu0 0.0
        %1644 = vmatprep.subr.mxu0 0.0
        %1645 = vmatpush1.msra.mxu0 0.0
        %1646 = vmatprep.subr.mxu0 0.0
        %1647 = vmatpush1.msra.mxu0 0.0
        %1648 = vmatprep.mubr.f32.mxu0 0.0
        %1649 = vmatmul.mubr.f32.gmra.mrb[0].mxu0 %v1582
        %v1650 = vpop.f32.mrb[0].mxu0
        %v1651 = vadd.f32 0.0, %v1650
        %v1652 = vpop.f32.mrb[0].mxu0
        %1653 = vdwg.mxu0
        %v1654 = vadd.f32 %v1496, %v1651
        %vm1655 = vcmask 253952
        %1656 = vst.msk [vmem:[%s584] sm:$0x1] %vm1655, %v1654
        %s1657 = sand.u32 %s348, 1
        %s1658 = scalar_lea.sflag [#allocation4], %s1657
        %s1659 = sand.u32 %s348, 1
        %s1660 = scalar_lea.vmem [#allocation14], %s1659
        // Predicated region
        $region105: #{tpu_custom_call.1} parent=75 // pred_check
          %p1661 = pneg %p358
        $region106: #{tpu_custom_call.1} parent=75 // pred_check_branch
          %1663 = sbr.rel (%p1661) target = $region108
        $region107: #{tpu_custom_call.1} parent=75 // pred_region
          %s1665 = ssub.s32 16, 16
          %1666 = vsyncadd %s1658, %s1665
          %s1667 = smul.addr %s36, 16
          %s1668 = scalar_lea.hbm %s14, %s1667
          %s1670 = sshll.u32 %s1660, 4
          %s1671 = int_to_ptr.vmem [resolvable:$true] %s1670
          %1673 = dma.vmem_to_hbm [thread:$0]  %s1671, 16, %s1668, %s1658
        $region108: #{tpu_custom_call.1} parent=75 // pred_fallthru
          _
      $region76: #{tpu_custom_call.1} parent=5 // pred_fallthru
        _
      %p1674 = scmp.le.s32.totalorder 2, %s31
      // Predicated region
      $region109: #{tpu_custom_call.1} parent=5 // pred_check
        %p1675 = pneg %p1674
      $region110: #{tpu_custom_call.1} parent=5 // pred_check_branch
        %1677 = sbr.rel (%p1675) target = $region112
      $region111: #{tpu_custom_call.1} parent=5 // pred_region
        %s1678 = ssub.s32 %s31, 2
        // Predicated region
        $region113: #{tpu_custom_call.1} parent=111 // pred_check
          %p1679 = pneg %p364
        $region114: #{tpu_custom_call.1} parent=111 // pred_check_branch
          %1681 = sbr.rel (%p1679) target = $region116
        $region115: #{tpu_custom_call.1} parent=111 // pred_region
          %s1682 = sand.u32 %s349, 1
          %s1683 = scalar_lea.sflag [#allocation4], %s1682
          %s1684 = sand.u32 %s349, 1
          %s1685 = scalar_lea.vmem [#allocation14], %s1684
          %1686 = dma.done %s1683, 16
        $region116: #{tpu_custom_call.1} parent=111 // pred_fallthru
          _
      $region112: #{tpu_custom_call.1} parent=5 // pred_fallthru
        _
    $region6: #{tpu_custom_call.1} parent=1 // loop_footer
      %s35 = sadd.s32 1, %s31
    $region7: #{tpu_custom_call.1} parent=1 // loop_footer_branch
      %30 = sbr.rel target = $region3
    $region8: #{tpu_custom_call.1} parent=1 // loop_exit
      _
    %1687 = vsyncpa [#allocation3], 1
    %s1688 = scalar_lea.sflag [#allocation3], 1
    %1689 = vsyncpa %s1688, 1
    %1690 = vsyncpa [#allocation6], 1
    %s1691 = scalar_lea.sflag [#allocation6], 1
    %1692 = vsyncpa %s1691, 1
    %1693 = vsyncpa [#allocation9], 1
    %1694 = vsyncpa [#allocation12], 1
    %1695 = vsyncpa [#allocation4], 1
    %s1696 = scalar_lea.sflag [#allocation4], 1
    %1697 = vsyncpa %s1696, 1

</llo_original>
